<compile_context>
chip_gen: v7x
topology: tpu7x:2x2x1
jax: 0.10.0
libtpu: 0.0.40
codegen_flags: <defaults>
</compile_context>

<pallas_src>
import jax
import jax.numpy as jnp
from jax.experimental import pallas as pl
from jax.experimental.pallas import tpu as pltpu


def _dura_kernel(h_ref, r_ref, t_ref, o_ref):
    # o_ref block index is constant along the reduction axis (program_id(1)),
    # so it stays resident in VMEM and acts as a lane-dense vector accumulator.
    @pl.when(pl.program_id(1) == 0)
    def _():
        o_ref[...] = jnp.zeros_like(o_ref)

    h = h_ref[...]                      # (tb, D), native dtype
    t = t_ref[...]                      # (tb, D)
    r = r_ref[...]                      # (tb, D, D)

    # bmm(r^T, h[...,None])[b, j] = sum_i r[b, i, j] * h[b, i]   (MXU)
    rth = jnp.einsum(
        "bqi,bij->bqj", h[:, None, :], r,
        preferred_element_type=jnp.float32)[:, 0, :]             # (tb, D)
    # bmm(r, t[...,None])[b, i]   = sum_j r[b, i, j] * t[b, j]   (MXU)
    rt = jnp.einsum(
        "bqj,bij->bqi", t[:, None, :], r,
        preferred_element_type=jnp.float32)[:, 0, :]             # (tb, D)

    hf = h.astype(jnp.float32)
    tf = t.astype(jnp.float32)
    o_ref[...] += 2.0 * (hf * hf + tf * tf) + 0.5 * (rth * rth + rt * rt)


def _dura_norm(h, r, t, *, n_cores=2, target_r_bytes=2 * 1024 * 1024,
               max_tb=256):
    """Returns sum_b [ 2*(|h_b|^2+|t_b|^2) + 0.5*(|r_b^T h_b|^2+|r_b t_b|^2) ]."""
    N, D = h.shape
    assert r.shape == (N, D, D) and t.shape == (N, D)

    itemsize = jnp.dtype(r.dtype).itemsize
    # Batch tile: big enough (~1-2 MiB of r per step) to amortize the ~0.35us
    # per-grid-step overhead, small enough for v7x's 64 MiB VMEM when double
    # buffered, and capped to bound the unrolled batched-matmul count.
    tb = max(8, (target_r_bytes // (D * D * itemsize)) // 8 * 8)
    tb = min(tb, max_tb)
    # Don't make the tile larger than each core's share of the batch.
    tb = min(tb, max(8, (pl.cdiv(N, n_cores) + 7) // 8 * 8))

    chunk = n_cores * tb
    n_pad = pl.cdiv(N, chunk) * chunk
    if n_pad != N:
        pad = n_pad - N                 # zero rows contribute 0 to the sum
        h = jnp.pad(h, ((0, pad), (0, 0)))
        t = jnp.pad(t, ((0, pad), (0, 0)))
        r = jnp.pad(r, ((0, pad), (0, 0), (0, 0)))
    nsteps = n_pad // chunk

    out = pl.pallas_call(
        _dura_kernel,
        out_shape=jax.ShapeDtypeStruct((n_cores * tb, D), jnp.float32),
        grid_spec=pltpu.PrefetchScalarGridSpec(
            num_scalar_prefetch=0,
            grid=(n_cores, nsteps),
            in_specs=[
                pl.BlockSpec((tb, D), lambda c, i: (c * nsteps + i, 0)),
                pl.BlockSpec((tb, D, D), lambda c, i: (c * nsteps + i, 0, 0)),
                pl.BlockSpec((tb, D), lambda c, i: (c * nsteps + i, 0)),
            ],
            # One private accumulator block per core -> no cross-core race.
            out_specs=pl.BlockSpec((tb, D), lambda c, i: (c, 0)),
        ),
        compiler_params=pltpu.CompilerParams(
            dimension_semantics=("parallel", "arbitrary"),
            vmem_limit_bytes=48 * 1024 * 1024,
        ),
    )(h, r, t)
    # Final reduce-to-scalar happens once, outside the hot loop.
    return jnp.sum(out)


def dura_rescal_w(factors, weight):
    """factors: sequence of (h, r, t) triples. Returns a scalar."""
    # Fuse all factors into a single kernel launch along the batch axis.
    h_all = jnp.concatenate([f[0] for f in factors], axis=0)
    r_all = jnp.concatenate([f[1] for f in factors], axis=0)
    t_all = jnp.concatenate([f[2] for f in factors], axis=0)
    norm = _dura_norm(h_all, r_all, t_all)
    return jnp.float32(weight) * norm / jnp.float32(factors[-1][0].shape[0])


def _reference(factors, weight):
    norm = 0.0
    for (h, r, t) in factors:
        h32 = h.astype(jnp.float32)
        r32 = r.astype(jnp.float32)
        t32 = t.astype(jnp.float32)
        norm = norm + 2.0 * jnp.sum(h32 ** 2 + t32 ** 2)
        rth = jnp.einsum("bij,bi->bj", r32, h32)
        rt = jnp.einsum("bij,bj->bi", r32, t32)
        norm = norm + 0.5 * jnp.sum(rth ** 2 + rt ** 2)
    return weight * norm / factors[-1][0].shape[0]


if __name__ == "__main__":
    key = jax.random.PRNGKey(0)
    B, D = 16, 32
    weight = 0.1

    k1, k2, k3, k4, k5, k6 = jax.random.split(key, 6)
    # Two factors, mirroring the "for factor in factors" loop.
    factors = [
        (jax.random.normal(k1, (B, D), jnp.float32),
         jax.random.normal(k2, (B, D, D), jnp.float32),
         jax.random.normal(k3, (B, D), jnp.float32)),
        (jax.random.normal(k4, (B, D), jnp.float32),
         jax.random.normal(k5, (B, D, D), jnp.float32),
         jax.random.normal(k6, (B, D), jnp.float32)),
    ]

    out = dura_rescal_w(factors, weight)
    out = jax.block_until_ready(out)

    ref = _reference(factors, weight)
    # rtol accounts for possible multi-pass f32 MXU accumulation differences
    # between the in-kernel dots and the XLA reference einsums.
    assert jnp.allclose(out, ref, rtol=1e-3, atol=1e-3), (out, ref)
    print("KERNEL_OK")
</pallas_src>

<mosaic_0001>
module attributes {stable_mosaic.version = 11 : i64} {
  func.func @_dura_kernel(%arg0: i32, %arg1: i32, %arg2: memref<16x32xf32, #tpu.memory_space<vmem>>, %arg3: memref<16x32x32xf32, #tpu.memory_space<vmem>>, %arg4: memref<16x32xf32, #tpu.memory_space<vmem>>, %arg5: memref<16x32xf32, #tpu.memory_space<vmem>>) attributes {dimension_semantics = [#tpu.dimension_semantics<parallel>, #tpu.dimension_semantics<arbitrary>], iteration_bounds = array<i64: 2, 1>, scalar_prefetch = 0 : i64, scratch_operands = 0 : i64, tpu.core_type = #tpu.core_type<tc>, window_params = [{transform_indices = @transform_0, window_bounds = array<i64: 16, 32>}, {transform_indices = @transform_1, window_bounds = array<i64: 16, 32, 32>}, {transform_indices = @transform_2, window_bounds = array<i64: 16, 32>}, {transform_indices = @transform_3, window_bounds = array<i64: 16, 32>}]} {
    %c0_i32 = arith.constant 0 : i32
    %0 = arith.cmpi eq, %arg1, %c0_i32 : i32
    %1 = arith.extui %0 : i1 to i32
    %c0_i32_0 = arith.constant 0 : i32
    %2 = arith.cmpi ne, %1, %c0_i32_0 : i32
    scf.if %2 {
      %cst_14 = arith.constant 0.000000e+00 : f32
      %26 = vector.broadcast %cst_14 : f32 to vector<16x32xf32>
      %c0_15 = arith.constant 0 : index
      %c0_16 = arith.constant 0 : index
      %27 = vector.load %arg5[%c0_15, %c0_16] : memref<16x32xf32, #tpu.memory_space<vmem>>, vector<16x32xf32>
      tpu.vector_store %arg5[%c0_15, %c0_16], %26 {strides = array<i32>} : memref<16x32xf32, #tpu.memory_space<vmem>>, vector<16x32xf32>,
    } else {
    }
    %c0 = arith.constant 0 : index
    %c0_1 = arith.constant 0 : index
    %3 = vector.load %arg2[%c0, %c0_1] : memref<16x32xf32, #tpu.memory_space<vmem>>, vector<16x32xf32>
    %c0_2 = arith.constant 0 : index
    %c0_3 = arith.constant 0 : index
    %4 = vector.load %arg4[%c0_2, %c0_3] : memref<16x32xf32, #tpu.memory_space<vmem>>, vector<16x32xf32>
    %c0_4 = arith.constant 0 : index
    %c0_5 = arith.constant 0 : index
    %c0_6 = arith.constant 0 : index
    %5 = vector.load %arg3[%c0_4, %c0_5, %c0_6] : memref<16x32x32xf32, #tpu.memory_space<vmem>>, vector<16x32x32xf32>
    %6 = vector.shape_cast %3 : vector<16x32xf32> to vector<16x1x32xf32>
    "tpu.trace_start"() <{level = 10 : i32, message = "bqi,bij->bqj"}> : () -> ()
    %cst = arith.constant dense<0.000000e+00> : vector<16x1x32xf32>
    %7 = tpu.matmul %6, %5, %cst {dimension_numbers = #tpu.dot_dimension_numbers<[2], [1], [1], [2], [0, 0, 0, 1, 1, 2], [0], [0]>} : vector<16x1x32xf32>, vector<16x32x32xf32>, vector<16x1x32xf32> -> vector<16x1x32xf32>
    "tpu.trace_stop"() : () -> ()
    %8 = vector.shape_cast %7 : vector<16x1x32xf32> to vector<16x32xf32>
    %9 = vector.shape_cast %4 : vector<16x32xf32> to vector<16x1x32xf32>
    "tpu.trace_start"() <{level = 10 : i32, message = "bqj,bij->bqi"}> : () -> ()
    %cst_7 = arith.constant dense<0.000000e+00> : vector<16x1x32xf32>
    %10 = tpu.matmul %9, %5, %cst_7 {dimension_numbers = #tpu.dot_dimension_numbers<[2], [2], [1], [1], [0, 0, 0, 1, 1, 1], [0], [0]>} : vector<16x1x32xf32>, vector<16x32x32xf32>, vector<16x1x32xf32> -> vector<16x1x32xf32>
    "tpu.trace_stop"() : () -> ()
    %11 = vector.shape_cast %10 : vector<16x1x32xf32> to vector<16x32xf32>
    %c0_8 = arith.constant 0 : index
    %c0_9 = arith.constant 0 : index
    %12 = vector.load %arg5[%c0_8, %c0_9] : memref<16x32xf32, #tpu.memory_space<vmem>>, vector<16x32xf32>
    %13 = arith.mulf %3, %3 : vector<16x32xf32>
    %14 = arith.mulf %4, %4 : vector<16x32xf32>
    %15 = arith.addf %13, %14 : vector<16x32xf32>
    %cst_10 = arith.constant 2.000000e+00 : f32
    %16 = vector.broadcast %cst_10 : f32 to vector<16x32xf32>
    %17 = arith.mulf %16, %15 : vector<16x32xf32>
    %18 = arith.mulf %8, %8 : vector<16x32xf32>
    %19 = arith.mulf %11, %11 : vector<16x32xf32>
    %20 = arith.addf %18, %19 : vector<16x32xf32>
    %cst_11 = arith.constant 5.000000e-01 : f32
    %21 = vector.broadcast %cst_11 : f32 to vector<16x32xf32>
    %22 = arith.mulf %21, %20 : vector<16x32xf32>
    %23 = arith.addf %17, %22 : vector<16x32xf32>
    %24 = arith.addf %12, %23 : vector<16x32xf32>
    %c0_12 = arith.constant 0 : index
    %c0_13 = arith.constant 0 : index
    %25 = vector.load %arg5[%c0_12, %c0_13] : memref<16x32xf32, #tpu.memory_space<vmem>>, vector<16x32xf32>
    tpu.vector_store %arg5[%c0_12, %c0_13], %24 {strides = array<i32>} : memref<16x32xf32, #tpu.memory_space<vmem>>, vector<16x32xf32>,
    return
  }
  func.func @transform_0(%arg0: i32, %arg1: i32) -> (i32, i32) {
    %c1_i32 = arith.constant 1 : i32
    %0 = arith.muli %arg0, %c1_i32 : i32
    %1 = arith.addi %0, %arg1 : i32
    %c0_i32 = arith.constant 0 : i32
    %c0_i32_0 = arith.constant 0 : i32
    return %1, %c0_i32 : i32, i32
  }
  func.func @transform_1(%arg0: i32, %arg1: i32) -> (i32, i32, i32) {
    %c1_i32 = arith.constant 1 : i32
    %0 = arith.muli %arg0, %c1_i32 : i32
    %1 = arith.addi %0, %arg1 : i32
    %c0_i32 = arith.constant 0 : i32
    %c0_i32_0 = arith.constant 0 : i32
    %c0_i32_1 = arith.constant 0 : i32
    return %1, %c0_i32, %c0_i32_0 : i32, i32, i32
  }
  func.func @transform_2(%arg0: i32, %arg1: i32) -> (i32, i32) {
    %c1_i32 = arith.constant 1 : i32
    %0 = arith.muli %arg0, %c1_i32 : i32
    %1 = arith.addi %0, %arg1 : i32
    %c0_i32 = arith.constant 0 : i32
    %c0_i32_0 = arith.constant 0 : i32
    return %1, %c0_i32 : i32, i32
  }
  func.func @transform_3(%arg0: i32, %arg1: i32) -> (i32, i32) {
    %c0_i32 = arith.constant 0 : i32
    %c0_i32_0 = arith.constant 0 : i32
    return %arg0, %c0_i32 : i32, i32
  }
}

</mosaic_0001>

<llo_original>
// kernel: tpu_custom_call.1
$region0: #{tpu_custom_call.1}
  #allocation0 [shape = 'u32[]', space=smem, size = 0x4, offset = 0x4, fixed_abs, tag = 'smem constant byte address 0x4 - core index']
  #allocation1 [shape = 'u32[144,128]{1,0:T(1,128)}', space=vmem, size = 0x12000, scoped, tag = 'internal scratch']
  %s0 = inlined_call_operand.hbm [shape: f32[32,32], index: 0, kind: input, shape index: {}]
  %s1 = inlined_call_operand.hbm [shape: f32[32,32,32], index: 1, kind: input, shape index: {}]
  %s2 = inlined_call_operand.hbm [shape: f32[32,32], index: 2, kind: input, shape index: {}]
  %s3 = inlined_call_operand.hbm [shape: f32[32,32], index: 3, kind: output, shape index: {}]
  %s4 = sld [smem:[#allocation0]]
  $region61: #{tpu_custom_call.1} parent=0
    _
  %s6 = ssub.s32 1, %s4
  %s7 = scalar_select 0, %s6, %s4
  $region1: #{tpu_custom_call.1} parent=0
    #allocation2 [shape = 'u8[16384]{0}', space=vmem, size = 0x4000, scoped, tag = 'input window, operand 0']
    #allocation3 [shape = 's32[2]{0}', space=sflag, size = 0x8, scoped, tag = 'scoped memory for tpu_custom_call.1']
    #allocation4 [shape = 's32[2]{0}', space=sflag, size = 0x8, scoped, tag = 'scoped memory for tpu_custom_call.1']
    #allocation5 [shape = 'u8[524288]{0}', space=vmem, size = 0x80000, scoped, tag = 'input window, operand 1']
    #allocation6 [shape = 's32[2]{0}', space=sflag, size = 0x8, scoped, tag = 'scoped memory for tpu_custom_call.1']
    #allocation7 [shape = 'u8[16384]{0}', space=vmem, size = 0x4000, scoped, tag = 'input window, operand 2']
    #allocation8 [shape = 'u8[16384]{0}', space=vmem, size = 0x4000, scoped, tag = 'output window, operand 0']
    %8 = vsyncpa [#allocation3], 0
    %s9 = scalar_lea.sflag [#allocation3], 1
    %10 = vsyncpa %s9, 0
    %11 = vsyncpa [#allocation6], 0
    %s12 = scalar_lea.sflag [#allocation6], 1
    %13 = vsyncpa %s12, 0
    %14 = vsyncpa [#allocation4], 0
    %s15 = scalar_lea.sflag [#allocation4], 1
    %16 = vsyncpa %s15, 0
    loop: start=0, step=1, limit=4
    $region2: #{tpu_custom_call.1} parent=1 // loop_pre_header
      _
    $region3: #{tpu_custom_call.1} parent=1 // loop_header
      %s18 = sphi 0, %s22
      %p19 = scmp.ge.s32.totalorder %s18, 4
      %s25 = sphi 0, %s37
      %s26 = sphi 0, %s33
      %s27 = sphi 0, %s25
      %s28 = sphi 0, %s26
      %s29 = sphi 0, %s27
      %s30 = sphi 0, %s28
      %s42 = sphi 0, %s44
      %s45 = sphi 0, %s42
      %s46 = sphi 0, %s45
      %s62 = sphi 0, %s46
      %s70 = sphi 0, %s72
      %s73 = sphi 0, %s70
      %s74 = sphi 0, %s73
      %s90 = sphi 0, %s74
      %s98 = sphi 0, %s100
      %s101 = sphi 0, %s98
      %s102 = sphi 0, %s101
      %s118 = sphi 0, %s102
      %s124 = sphi 0, %s126
      %s127 = sphi 0, %s124
      %s128 = sphi 0, %s127
      %s144 = sphi 0, %s128
    $region4: #{tpu_custom_call.1} parent=1 // loop_header_branch
      %21 = sbr.rel (%p19) target = $region8
    $region5: #{tpu_custom_call.1} parent=1 // loop_body
      %s23 = ssub.s32 %s18, 1
      %s24 = ssub.s32 %s18, 2
      %s31 = sadd.s32 1, %s26
      %p32 = scmp.ge.s32.totalorder %s31, 1
      %s33 = scalar_select %p32, 0, %s31
      %s34 = sadd.s32 1, %s25
      %s35 = scalar_select %p32, %s34, %s25
      %p36 = scmp.ge.s32.totalorder %s35, 2
      %s37 = scalar_select %p36, 0, %s35
      %s38 = sadd.s32 %s25, %s26
      %s39 = sadd.s32 %s37, %s33
      %s40 = ssub.s32 %s38, %s39
      %p41 = scmp.eq.s32.totalorder %s40, 0
      %s43 = sadd.s32 %s42, 1
      %s44 = scalar_select %p41, %s42, %s43
      %p47 = pneg %p41
      %p48 = scmp.eq.s32.totalorder %s18, 1
      %p49 = por %p47, %p48
      %p50 = scmp.ne.s32.totalorder %s42, %s45
      %p51 = scmp.eq.s32.totalorder %s18, 0
      %p52 = por %p50, %p51
      %p53 = scmp.ne.s32.totalorder %s42, %s45
      %p54 = scmp.eq.s32.totalorder %s23, 1
      %p55 = por %p53, %p54
      %p56 = scmp.ne.s32.totalorder %s45, %s46
      %p57 = scmp.eq.s32.totalorder %s23, 0
      %p58 = por %p56, %p57
      %p59 = scmp.ne.s32.totalorder %s45, %s46
      %p60 = scmp.eq.s32.totalorder %s24, 1
      %p61 = por %p59, %p60
      %p63 = scmp.ne.s32.totalorder %s46, %s62
      %p64 = scmp.eq.s32.totalorder %s24, 0
      %p65 = por %p63, %p64
      %s66 = sadd.s32 %s25, %s26
      %s67 = sadd.s32 %s37, %s33
      %s68 = ssub.s32 %s66, %s67
      %p69 = scmp.eq.s32.totalorder %s68, 0
      %s71 = sadd.s32 %s70, 1
      %s72 = scalar_select %p69, %s70, %s71
      %p75 = pneg %p69
      %p76 = scmp.eq.s32.totalorder %s18, 1
      %p77 = por %p75, %p76
      %p78 = scmp.ne.s32.totalorder %s70, %s73
      %p79 = scmp.eq.s32.totalorder %s18, 0
      %p80 = por %p78, %p79
      %p81 = scmp.ne.s32.totalorder %s70, %s73
      %p82 = scmp.eq.s32.totalorder %s23, 1
      %p83 = por %p81, %p82
      %p84 = scmp.ne.s32.totalorder %s73, %s74
      %p85 = scmp.eq.s32.totalorder %s23, 0
      %p86 = por %p84, %p85
      %p87 = scmp.ne.s32.totalorder %s73, %s74
      %p88 = scmp.eq.s32.totalorder %s24, 1
      %p89 = por %p87, %p88
      %p91 = scmp.ne.s32.totalorder %s74, %s90
      %p92 = scmp.eq.s32.totalorder %s24, 0
      %p93 = por %p91, %p92
      %s94 = sadd.s32 %s25, %s26
      %s95 = sadd.s32 %s37, %s33
      %s96 = ssub.s32 %s94, %s95
      %p97 = scmp.eq.s32.totalorder %s96, 0
      %s99 = sadd.s32 %s98, 1
      %s100 = scalar_select %p97, %s98, %s99
      %p103 = pneg %p97
      %p104 = scmp.eq.s32.totalorder %s18, 1
      %p105 = por %p103, %p104
      %p106 = scmp.ne.s32.totalorder %s98, %s101
      %p107 = scmp.eq.s32.totalorder %s18, 0
      %p108 = por %p106, %p107
      %p109 = scmp.ne.s32.totalorder %s98, %s101
      %p110 = scmp.eq.s32.totalorder %s23, 1
      %p111 = por %p109, %p110
      %p112 = scmp.ne.s32.totalorder %s101, %s102
      %p113 = scmp.eq.s32.totalorder %s23, 0
      %p114 = por %p112, %p113
      %p115 = scmp.ne.s32.totalorder %s101, %s102
      %p116 = scmp.eq.s32.totalorder %s24, 1
      %p117 = por %p115, %p116
      %p119 = scmp.ne.s32.totalorder %s102, %s118
      %p120 = scmp.eq.s32.totalorder %s24, 0
      %p121 = por %p119, %p120
      %s122 = ssub.s32 %s25, %s37
      %p123 = scmp.eq.s32.totalorder %s122, 0
      %s125 = sadd.s32 %s124, 1
      %s126 = scalar_select %p123, %s124, %s125
      %p129 = pneg %p123
      %p130 = scmp.eq.s32.totalorder %s18, 1
      %p131 = por %p129, %p130
      %p132 = scmp.ne.s32.totalorder %s124, %s127
      %p133 = scmp.eq.s32.totalorder %s18, 0
      %p134 = por %p132, %p133
      %p135 = scmp.ne.s32.totalorder %s124, %s127
      %p136 = scmp.eq.s32.totalorder %s23, 1
      %p137 = por %p135, %p136
      %p138 = scmp.ne.s32.totalorder %s127, %s128
      %p139 = scmp.eq.s32.totalorder %s23, 0
      %p140 = por %p138, %p139
      %p141 = scmp.ne.s32.totalorder %s127, %s128
      %p142 = scmp.eq.s32.totalorder %s24, 1
      %p143 = por %p141, %p142
      %p145 = scmp.ne.s32.totalorder %s128, %s144
      %p146 = scmp.eq.s32.totalorder %s24, 0
      %p147 = por %p145, %p146
      %p148 = scmp.le.s32.totalorder 1, %s18
      %p149 = scmp.lt.s32.totalorder %s18, 3
      %p150 = pnand %p148, %p149
      %p151 = pneg %p150
      // Predicated region
      $region9: #{tpu_custom_call.1} parent=5 // pred_check
        _
      $region10: #{tpu_custom_call.1} parent=5 // pred_check_branch
        %153 = sbr.rel (%p150) target = $region12
      $region11: #{tpu_custom_call.1} parent=5 // pred_region
        %s154 = ssub.s32 %s18, 1
      $region12: #{tpu_custom_call.1} parent=5 // pred_fallthru
        _
      %p155 = scmp.lt.s32.totalorder %s18, 2
      // Predicated region
      $region13: #{tpu_custom_call.1} parent=5 // pred_check
        %p156 = pneg %p155
      $region14: #{tpu_custom_call.1} parent=5 // pred_check_branch
        %158 = sbr.rel (%p156) target = $region16
      $region15: #{tpu_custom_call.1} parent=5 // pred_region
        // Predicated region
        $region17: #{tpu_custom_call.1} parent=15 // pred_check
          %p159 = pneg %p52
        $region18: #{tpu_custom_call.1} parent=15 // pred_check_branch
          %161 = sbr.rel (%p159) target = $region20
        $region19: #{tpu_custom_call.1} parent=15 // pred_region
          %s162 = sand.u32 %s42, 1
          %s163 = scalar_lea.sflag [#allocation3], %s162
          %s164 = sand.u32 %s42, 1
          %s165 = smul.addr %s164, 16
          %s166 = scalar_lea.vmem [#allocation2], %s165
          %s167 = sadd.s32 %s25, %s26
          %s168 = smul.u32 2, %s167
          %s170 = ssub.s32 256, 256
          %171 = vsyncadd %s163, %s170
          %s172 = smul.addr %s168, 128
          %s173 = scalar_lea.hbm %s0, %s172
          %s174 = sshll.u32 %s166, 4
          %s175 = int_to_ptr.vmem [resolvable:$true] %s174
          %180 = dma.hbm_to_vmem [thread:$0]  %s173, 256, %s175, %s163, 128, 128, 8
        $region20: #{tpu_custom_call.1} parent=15 // pred_fallthru
          _
        // Predicated region
        $region21: #{tpu_custom_call.1} parent=15 // pred_check
          %p181 = pneg %p80
        $region22: #{tpu_custom_call.1} parent=15 // pred_check_branch
          %183 = sbr.rel (%p181) target = $region24
        $region23: #{tpu_custom_call.1} parent=15 // pred_region
          %s184 = sand.u32 %s18, 1
          %s185 = scalar_lea.sflag [#allocation6], %s184
          %s186 = sand.u32 %s70, 1
          %s187 = smul.addr %s186, 512
          %s188 = scalar_lea.vmem [#allocation5], %s187
          %s189 = sadd.s32 %s25, %s26
          %s190 = smul.u32 16, %s189
          %s192 = ssub.s32 8192, 8192
          %193 = vsyncadd %s185, %s192
          %s194 = smul.addr %s190, 4
          %s195 = smul.addr %s194, 128
          %s196 = scalar_lea.hbm %s1, %s195
          %s197 = sshll.u32 %s188, 4
          %s198 = int_to_ptr.vmem [resolvable:$true] %s197
          %203 = dma.hbm_to_vmem [thread:$0]  %s196, 8192, %s198, %s185, 128, 128, 8
        $region24: #{tpu_custom_call.1} parent=15 // pred_fallthru
          _
        // Predicated region
        $region25: #{tpu_custom_call.1} parent=15 // pred_check
          %p204 = pneg %p108
        $region26: #{tpu_custom_call.1} parent=15 // pred_check_branch
          %206 = sbr.rel (%p204) target = $region28
        $region27: #{tpu_custom_call.1} parent=15 // pred_region
          %s207 = sand.u32 %s18, 1
          %s208 = scalar_lea.sflag [#allocation6], %s207
          %s209 = sand.u32 %s98, 1
          %s210 = smul.addr %s209, 16
          %s211 = scalar_lea.vmem [#allocation7], %s210
          %s212 = sadd.s32 %s25, %s26
          %s213 = smul.u32 2, %s212
          %s215 = ssub.s32 256, 256
          %216 = vsyncadd %s208, %s215
          %s217 = smul.addr %s213, 128
          %s218 = scalar_lea.hbm %s2, %s217
          %s219 = sshll.u32 %s211, 4
          %s220 = int_to_ptr.vmem [resolvable:$true] %s219
          %225 = dma.hbm_to_vmem [thread:$0]  %s218, 256, %s220, %s208, 128, 128, 8
        $region28: #{tpu_custom_call.1} parent=15 // pred_fallthru
          _
      $region16: #{tpu_custom_call.1} parent=5 // pred_fallthru
        _
      %p226 = scmp.le.s32.totalorder 1, %s18
      %p227 = scmp.lt.s32.totalorder %s18, 3
      %p228 = pnand %p226, %p227
      %p229 = pneg %p228
      // Predicated region
      $region29: #{tpu_custom_call.1} parent=5 // pred_check
        _
      $region30: #{tpu_custom_call.1} parent=5 // pred_check_branch
        %231 = sbr.rel (%p228) target = $region32
      $region31: #{tpu_custom_call.1} parent=5 // pred_region
        %s232 = ssub.s32 %s18, 1
        %s233 = sand.u32 %s45, 1
        %s234 = scalar_lea.sflag [#allocation3], %s233
        %s235 = sand.u32 %s45, 1
        %s236 = smul.addr %s235, 16
        %s237 = scalar_lea.vmem [#allocation2], %s236
        // Predicated region
        $region33: #{tpu_custom_call.1} parent=31 // pred_check
          %p238 = pneg %p58
        $region34: #{tpu_custom_call.1} parent=31 // pred_check_branch
          %240 = sbr.rel (%p238) target = $region36
        $region35: #{tpu_custom_call.1} parent=31 // pred_region
          %241 = dma.done %s234, 256
        $region36: #{tpu_custom_call.1} parent=31 // pred_fallthru
          _
        %s242 = sand.u32 %s23, 1
        %s243 = scalar_lea.sflag [#allocation6], %s242
        %s244 = sand.u32 %s73, 1
        %s245 = smul.addr %s244, 512
        %s246 = scalar_lea.vmem [#allocation5], %s245
        // Predicated region
        $region37: #{tpu_custom_call.1} parent=31 // pred_check
          %p247 = pneg %p86
        $region38: #{tpu_custom_call.1} parent=31 // pred_check_branch
          %249 = sbr.rel (%p247) target = $region40
        $region39: #{tpu_custom_call.1} parent=31 // pred_region
          %250 = dma.done %s243, 8192
        $region40: #{tpu_custom_call.1} parent=31 // pred_fallthru
          _
        %s251 = sand.u32 %s23, 1
        %s252 = scalar_lea.sflag [#allocation6], %s251
        %s253 = sand.u32 %s101, 1
        %s254 = smul.addr %s253, 16
        %s255 = scalar_lea.vmem [#allocation7], %s254
        // Predicated region
        $region41: #{tpu_custom_call.1} parent=31 // pred_check
          %p256 = pneg %p114
        $region42: #{tpu_custom_call.1} parent=31 // pred_check_branch
          %258 = sbr.rel (%p256) target = $region44
        $region43: #{tpu_custom_call.1} parent=31 // pred_region
          %259 = dma.done %s252, 256
        $region44: #{tpu_custom_call.1} parent=31 // pred_fallthru
          _
        %s260 = sand.u32 %s45, 1
        %s261 = scalar_lea.sflag [#allocation3], %s260
        %s262 = sand.u32 %s45, 1
        %s263 = smul.addr %s262, 16
        %s264 = scalar_lea.vmem [#allocation2], %s263
        %p265 = pneg %p58
        %p266 = pneg %p55
        %s267 = sand.u32 %s23, 1
        %s268 = scalar_lea.sflag [#allocation6], %s267
        %s269 = sand.u32 %s73, 1
        %s270 = smul.addr %s269, 512
        %s271 = scalar_lea.vmem [#allocation5], %s270
        %p272 = pneg %p86
        %p273 = pneg %p83
        %s274 = sand.u32 %s23, 1
        %s275 = scalar_lea.sflag [#allocation6], %s274
        %s276 = sand.u32 %s101, 1
        %s277 = smul.addr %s276, 16
        %s278 = scalar_lea.vmem [#allocation7], %s277
        %p279 = pneg %p114
        %p280 = pneg %p111
        %p281 = pneg %p140
        %p282 = pneg %p137
        %s283 = sand.u32 %s127, 1
        %s284 = scalar_lea.sflag [#allocation4], %s283
        %s285 = sand.u32 %s127, 1
        %s286 = smul.addr %s285, 16
        %s287 = scalar_lea.vmem [#allocation8], %s286
        %s288 = sadd.s32 %s27, %s28
        %s289 = smul.u32 2, %s288
        %s290 = sadd.s32 %s27, %s28
        %s291 = smul.u32 16, %s290
        %s292 = sadd.s32 %s27, %s28
        %s293 = smul.u32 2, %s292
        %s294 = smul.u32 2, %s27
        %p295 = scmp.eq.s32.totalorder %s28, 0
        // Predicated region
        $region45: #{tpu_custom_call.1} parent=31 // pred_check
          %p296 = pneg %p295
        $region46: #{tpu_custom_call.1} parent=31 // pred_check_branch
          %298 = sbr.rel (%p296) target = $region48
        $region47: #{tpu_custom_call.1} parent=31 // pred_region
          %vm299 = vcmask 261120
          %300 = vst.msk [vmem:[%s287] sm:$0xff] %vm299, 0.0
          %301 = vst.msk [vmem:[%s287 + $0x8] sm:$0xff] %vm299, 0.0
        $region48: #{tpu_custom_call.1} parent=31 // pred_fallthru
          _
        %v302 = vld [vmem:[%s237] sm:$0xff]
        %v303 = vld [vmem:[%s237 + $0x8] sm:$0xff]
        %v304 = vld [vmem:[%s255] sm:$0xff]
        %v305 = vld [vmem:[%s255 + $0x8] sm:$0xff]
        %v306 = vld [vmem:[%s246] sm:$0xff]
        %v307 = vld [vmem:[%s246 + $0x8] sm:$0xff]
        %v308 = vld [vmem:[%s246 + $0x10] sm:$0xff]
        %v309 = vld [vmem:[%s246 + $0x18] sm:$0xff]
        %v310 = vld [vmem:[%s246 + $0x20] sm:$0xff]
        %v311 = vld [vmem:[%s246 + $0x28] sm:$0xff]
        %v312 = vld [vmem:[%s246 + $0x30] sm:$0xff]
        %v313 = vld [vmem:[%s246 + $0x38] sm:$0xff]
        %v314 = vld [vmem:[%s246 + $0x40] sm:$0xff]
        %v315 = vld [vmem:[%s246 + $0x48] sm:$0xff]
        %v316 = vld [vmem:[%s246 + $0x50] sm:$0xff]
        %v317 = vld [vmem:[%s246 + $0x58] sm:$0xff]
        %v318 = vld [vmem:[%s246 + $0x60] sm:$0xff]
        %v319 = vld [vmem:[%s246 + $0x68] sm:$0xff]
        %v320 = vld [vmem:[%s246 + $0x70] sm:$0xff]
        %v321 = vld [vmem:[%s246 + $0x78] sm:$0xff]
        %v322 = vld [vmem:[%s246 + $0x80] sm:$0xff]
        %v323 = vld [vmem:[%s246 + $0x88] sm:$0xff]
        %v324 = vld [vmem:[%s246 + $0x90] sm:$0xff]
        %v325 = vld [vmem:[%s246 + $0x98] sm:$0xff]
        %v326 = vld [vmem:[%s246 + $0xa0] sm:$0xff]
        %v327 = vld [vmem:[%s246 + $0xa8] sm:$0xff]
        %v328 = vld [vmem:[%s246 + $0xb0] sm:$0xff]
        %v329 = vld [vmem:[%s246 + $0xb8] sm:$0xff]
        %v330 = vld [vmem:[%s246 + $0xc0] sm:$0xff]
        %v331 = vld [vmem:[%s246 + $0xc8] sm:$0xff]
        %v332 = vld [vmem:[%s246 + $0xd0] sm:$0xff]
        %v333 = vld [vmem:[%s246 + $0xd8] sm:$0xff]
        %v334 = vld [vmem:[%s246 + $0xe0] sm:$0xff]
        %v335 = vld [vmem:[%s246 + $0xe8] sm:$0xff]
        %v336 = vld [vmem:[%s246 + $0xf0] sm:$0xff]
        %v337 = vld [vmem:[%s246 + $0xf8] sm:$0xff]
        %v338 = vld [vmem:[%s246 + $0x100] sm:$0xff]
        %v339 = vld [vmem:[%s246 + $0x108] sm:$0xff]
        %v340 = vld [vmem:[%s246 + $0x110] sm:$0xff]
        %v341 = vld [vmem:[%s246 + $0x118] sm:$0xff]
        %v342 = vld [vmem:[%s246 + $0x120] sm:$0xff]
        %v343 = vld [vmem:[%s246 + $0x128] sm:$0xff]
        %v344 = vld [vmem:[%s246 + $0x130] sm:$0xff]
        %v345 = vld [vmem:[%s246 + $0x138] sm:$0xff]
        %v346 = vld [vmem:[%s246 + $0x140] sm:$0xff]
        %v347 = vld [vmem:[%s246 + $0x148] sm:$0xff]
        %v348 = vld [vmem:[%s246 + $0x150] sm:$0xff]
        %v349 = vld [vmem:[%s246 + $0x158] sm:$0xff]
        %v350 = vld [vmem:[%s246 + $0x160] sm:$0xff]
        %v351 = vld [vmem:[%s246 + $0x168] sm:$0xff]
        %v352 = vld [vmem:[%s246 + $0x170] sm:$0xff]
        %v353 = vld [vmem:[%s246 + $0x178] sm:$0xff]
        %v354 = vld [vmem:[%s246 + $0x180] sm:$0xff]
        %v355 = vld [vmem:[%s246 + $0x188] sm:$0xff]
        %v356 = vld [vmem:[%s246 + $0x190] sm:$0xff]
        %v357 = vld [vmem:[%s246 + $0x198] sm:$0xff]
        %v358 = vld [vmem:[%s246 + $0x1a0] sm:$0xff]
        %v359 = vld [vmem:[%s246 + $0x1a8] sm:$0xff]
        %v360 = vld [vmem:[%s246 + $0x1b0] sm:$0xff]
        %v361 = vld [vmem:[%s246 + $0x1b8] sm:$0xff]
        %v362 = vld [vmem:[%s246 + $0x1c0] sm:$0xff]
        %v363 = vld [vmem:[%s246 + $0x1c8] sm:$0xff]
        %v364 = vld [vmem:[%s246 + $0x1d0] sm:$0xff]
        %v365 = vld [vmem:[%s246 + $0x1d8] sm:$0xff]
        %v366 = vld [vmem:[%s246 + $0x1e0] sm:$0xff]
        %v367 = vld [vmem:[%s246 + $0x1e8] sm:$0xff]
        %v368 = vld [vmem:[%s246 + $0x1f0] sm:$0xff]
        %v369 = vld [vmem:[%s246 + $0x1f8] sm:$0xff]
        %v372 = vcombine.high %v302, %v302
        %v374 = vunpack.c.l.s4 1966171168
        %v375 = vunpack.c.0.s8 %v374
        %v376 = vlaneseq
        %v377 = vshrl.u32 %v376, 7
        %v378 = vsub.s32 %v375, %v377
        %v379 = vrot.slane %v302, %v378
        %v381 = vunpack.c.l.s4 1966171168
        %v382 = vunpack.c.0.s8 %v381
        %v383 = vlaneseq
        %v384 = vshrl.u32 %v383, 7
        %v385 = vsub.s32 %v382, %v384
        %v386 = vrot.slane %v372, %v385
        %v387 = vcombine.high %v379, %v379
        %v388 = vcombine.high %v386, %v386
        %v390 = vunpack.c.l.s4 1966171168
        %v391 = vunpack.c.0.s8 %v390
        %v392 = vlaneseq
        %v393 = vshrl.u32 %v392, 7
        %v394 = vsub.s32 %v391, %v393
        %v395 = vrot.slane %v379, %v394
        %v397 = vunpack.c.l.s4 1966171168
        %v398 = vunpack.c.0.s8 %v397
        %v399 = vlaneseq
        %v400 = vshrl.u32 %v399, 7
        %v401 = vsub.s32 %v398, %v400
        %v402 = vrot.slane %v386, %v401
        %v404 = vunpack.c.l.s4 1966171168
        %v405 = vunpack.c.0.s8 %v404
        %v406 = vlaneseq
        %v407 = vshrl.u32 %v406, 7
        %v408 = vsub.s32 %v405, %v407
        %v409 = vrot.slane %v387, %v408
        %v411 = vunpack.c.l.s4 1966171168
        %v412 = vunpack.c.0.s8 %v411
        %v413 = vlaneseq
        %v414 = vshrl.u32 %v413, 7
        %v415 = vsub.s32 %v412, %v414
        %v416 = vrot.slane %v388, %v415
        %v417 = vcombine.high %v395, %v395
        %v418 = vcombine.high %v402, %v402
        %v419 = vcombine.high %v409, %v409
        %v420 = vcombine.high %v416, %v416
        %v421 = vcombine.high %v303, %v303
        %v423 = vunpack.c.l.s4 1966171168
        %v424 = vunpack.c.0.s8 %v423
        %v425 = vlaneseq
        %v426 = vshrl.u32 %v425, 7
        %v427 = vsub.s32 %v424, %v426
        %v428 = vrot.slane %v303, %v427
        %v430 = vunpack.c.l.s4 1966171168
        %v431 = vunpack.c.0.s8 %v430
        %v432 = vlaneseq
        %v433 = vshrl.u32 %v432, 7
        %v434 = vsub.s32 %v431, %v433
        %v435 = vrot.slane %v421, %v434
        %v436 = vcombine.high %v428, %v428
        %v437 = vcombine.high %v435, %v435
        %v439 = vunpack.c.l.s4 1966171168
        %v440 = vunpack.c.0.s8 %v439
        %v441 = vlaneseq
        %v442 = vshrl.u32 %v441, 7
        %v443 = vsub.s32 %v440, %v442
        %v444 = vrot.slane %v428, %v443
        %v446 = vunpack.c.l.s4 1966171168
        %v447 = vunpack.c.0.s8 %v446
        %v448 = vlaneseq
        %v449 = vshrl.u32 %v448, 7
        %v450 = vsub.s32 %v447, %v449
        %v451 = vrot.slane %v435, %v450
        %v453 = vunpack.c.l.s4 1966171168
        %v454 = vunpack.c.0.s8 %v453
        %v455 = vlaneseq
        %v456 = vshrl.u32 %v455, 7
        %v457 = vsub.s32 %v454, %v456
        %v458 = vrot.slane %v436, %v457
        %v460 = vunpack.c.l.s4 1966171168
        %v461 = vunpack.c.0.s8 %v460
        %v462 = vlaneseq
        %v463 = vshrl.u32 %v462, 7
        %v464 = vsub.s32 %v461, %v463
        %v465 = vrot.slane %v437, %v464
        %v466 = vcombine.high %v444, %v444
        %v467 = vcombine.high %v451, %v451
        %v468 = vcombine.high %v458, %v458
        %v469 = vcombine.high %v465, %v465
        %vm470 = vcmask 261120
        %v471 = vsel %vm470, %v395, 0
        %473 = vmatprep.subr.mxu0 0.0
        %474 = vmatpush1.msra.mxu0 %v306
        %475 = vmatprep.subr.mxu0 0.0
        %476 = vmatpush1.msra.mxu0 %v307
        %477 = vmatprep.subr.mxu0 0.0
        %478 = vmatpush1.msra.mxu0 %v308
        %479 = vmatprep.subr.mxu0 0.0
        %480 = vmatpush1.msra.mxu0 %v309
        %481 = vmatprep.subr.mxu0 0.0
        %482 = vmatpush1.msra.mxu0 0.0
        %483 = vmatprep.subr.mxu0 0.0
        %484 = vmatpush1.msra.mxu0 0.0
        %485 = vmatprep.subr.mxu0 0.0
        %486 = vmatpush1.msra.mxu0 0.0
        %487 = vmatprep.subr.mxu0 0.0
        %488 = vmatpush1.msra.mxu0 0.0
        %489 = vmatprep.subr.mxu0 0.0
        %490 = vmatpush1.msra.mxu0 0.0
        %491 = vmatprep.subr.mxu0 0.0
        %492 = vmatpush1.msra.mxu0 0.0
        %493 = vmatprep.subr.mxu0 0.0
        %494 = vmatpush1.msra.mxu0 0.0
        %495 = vmatprep.subr.mxu0 0.0
        %496 = vmatpush1.msra.mxu0 0.0
        %497 = vmatprep.subr.mxu0 0.0
        %498 = vmatpush1.msra.mxu0 0.0
        %499 = vmatprep.subr.mxu0 0.0
        %500 = vmatpush1.msra.mxu0 0.0
        %501 = vmatprep.subr.mxu0 0.0
        %502 = vmatpush1.msra.mxu0 0.0
        %503 = vmatprep.subr.mxu0 0.0
        %504 = vmatpush1.msra.mxu0 0.0
        %505 = vmatprep.subr.mxu0 0.0
        %506 = vmatpush1.msra.mxu0 0.0
        %507 = vmatprep.subr.mxu0 0.0
        %508 = vmatpush1.msra.mxu0 0.0
        %509 = vmatprep.subr.mxu0 0.0
        %510 = vmatpush1.msra.mxu0 0.0
        %511 = vmatprep.subr.mxu0 0.0
        %512 = vmatpush1.msra.mxu0 0.0
        %513 = vmatprep.subr.mxu0 0.0
        %514 = vmatpush1.msra.mxu0 0.0
        %515 = vmatprep.subr.mxu0 0.0
        %516 = vmatpush1.msra.mxu0 0.0
        %517 = vmatprep.subr.mxu0 0.0
        %518 = vmatpush1.msra.mxu0 0.0
        %519 = vmatprep.subr.mxu0 0.0
        %520 = vmatpush1.msra.mxu0 0.0
        %521 = vmatprep.subr.mxu0 0.0
        %522 = vmatpush1.msra.mxu0 0.0
        %523 = vmatprep.subr.mxu0 0.0
        %524 = vmatpush1.msra.mxu0 0.0
        %525 = vmatprep.subr.mxu0 0.0
        %526 = vmatpush1.msra.mxu0 0.0
        %527 = vmatprep.subr.mxu0 0.0
        %528 = vmatpush1.msra.mxu0 0.0
        %529 = vmatprep.subr.mxu0 0.0
        %530 = vmatpush1.msra.mxu0 0.0
        %531 = vmatprep.subr.mxu0 0.0
        %532 = vmatpush1.msra.mxu0 0.0
        %533 = vmatprep.subr.mxu0 0.0
        %534 = vmatpush1.msra.mxu0 0.0
        %535 = vmatprep.subr.mxu0 0.0
        %536 = vmatpush1.msra.mxu0 0.0
        %537 = vmatprep.mubr.f32.mxu0 0.0
        %538 = vmatmul.mubr.f32.gmra.mrb[0].mxu0 %v471
        %v539 = vpop.f32.mrb[0].mxu0
        %v540 = vadd.f32 0.0, %v539
        %v541 = vpop.f32.mrb[0].mxu0
        %542 = vdwg.mxu0
        %v543 = vsel %vm470, %v409, 0
        %545 = vmatprep.subr.mxu0 0.0
        %546 = vmatpush1.msra.mxu0 %v310
        %547 = vmatprep.subr.mxu0 0.0
        %548 = vmatpush1.msra.mxu0 %v311
        %549 = vmatprep.subr.mxu0 0.0
        %550 = vmatpush1.msra.mxu0 %v312
        %551 = vmatprep.subr.mxu0 0.0
        %552 = vmatpush1.msra.mxu0 %v313
        %553 = vmatprep.subr.mxu0 0.0
        %554 = vmatpush1.msra.mxu0 0.0
        %555 = vmatprep.subr.mxu0 0.0
        %556 = vmatpush1.msra.mxu0 0.0
        %557 = vmatprep.subr.mxu0 0.0
        %558 = vmatpush1.msra.mxu0 0.0
        %559 = vmatprep.subr.mxu0 0.0
        %560 = vmatpush1.msra.mxu0 0.0
        %561 = vmatprep.subr.mxu0 0.0
        %562 = vmatpush1.msra.mxu0 0.0
        %563 = vmatprep.subr.mxu0 0.0
        %564 = vmatpush1.msra.mxu0 0.0
        %565 = vmatprep.subr.mxu0 0.0
        %566 = vmatpush1.msra.mxu0 0.0
        %567 = vmatprep.subr.mxu0 0.0
        %568 = vmatpush1.msra.mxu0 0.0
        %569 = vmatprep.subr.mxu0 0.0
        %570 = vmatpush1.msra.mxu0 0.0
        %571 = vmatprep.subr.mxu0 0.0
        %572 = vmatpush1.msra.mxu0 0.0
        %573 = vmatprep.subr.mxu0 0.0
        %574 = vmatpush1.msra.mxu0 0.0
        %575 = vmatprep.subr.mxu0 0.0
        %576 = vmatpush1.msra.mxu0 0.0
        %577 = vmatprep.subr.mxu0 0.0
        %578 = vmatpush1.msra.mxu0 0.0
        %579 = vmatprep.subr.mxu0 0.0
        %580 = vmatpush1.msra.mxu0 0.0
        %581 = vmatprep.subr.mxu0 0.0
        %582 = vmatpush1.msra.mxu0 0.0
        %583 = vmatprep.subr.mxu0 0.0
        %584 = vmatpush1.msra.mxu0 0.0
        %585 = vmatprep.subr.mxu0 0.0
        %586 = vmatpush1.msra.mxu0 0.0
        %587 = vmatprep.subr.mxu0 0.0
        %588 = vmatpush1.msra.mxu0 0.0
        %589 = vmatprep.subr.mxu0 0.0
        %590 = vmatpush1.msra.mxu0 0.0
        %591 = vmatprep.subr.mxu0 0.0
        %592 = vmatpush1.msra.mxu0 0.0
        %593 = vmatprep.subr.mxu0 0.0
        %594 = vmatpush1.msra.mxu0 0.0
        %595 = vmatprep.subr.mxu0 0.0
        %596 = vmatpush1.msra.mxu0 0.0
        %597 = vmatprep.subr.mxu0 0.0
        %598 = vmatpush1.msra.mxu0 0.0
        %599 = vmatprep.subr.mxu0 0.0
        %600 = vmatpush1.msra.mxu0 0.0
        %601 = vmatprep.subr.mxu0 0.0
        %602 = vmatpush1.msra.mxu0 0.0
        %603 = vmatprep.subr.mxu0 0.0
        %604 = vmatpush1.msra.mxu0 0.0
        %605 = vmatprep.subr.mxu0 0.0
        %606 = vmatpush1.msra.mxu0 0.0
        %607 = vmatprep.subr.mxu0 0.0
        %608 = vmatpush1.msra.mxu0 0.0
        %609 = vmatprep.mubr.f32.mxu0 0.0
        %610 = vmatmul.mubr.f32.gmra.mrb[0].mxu0 %v543
        %v611 = vpop.f32.mrb[0].mxu0
        %v612 = vadd.f32 0.0, %v611
        %v613 = vpop.f32.mrb[0].mxu0
        %614 = vdwg.mxu0
        %v615 = vsel %vm470, %v417, 0
        %617 = vmatprep.subr.mxu0 0.0
        %618 = vmatpush1.msra.mxu0 %v314
        %619 = vmatprep.subr.mxu0 0.0
        %620 = vmatpush1.msra.mxu0 %v315
        %621 = vmatprep.subr.mxu0 0.0
        %622 = vmatpush1.msra.mxu0 %v316
        %623 = vmatprep.subr.mxu0 0.0
        %624 = vmatpush1.msra.mxu0 %v317
        %625 = vmatprep.subr.mxu0 0.0
        %626 = vmatpush1.msra.mxu0 0.0
        %627 = vmatprep.subr.mxu0 0.0
        %628 = vmatpush1.msra.mxu0 0.0
        %629 = vmatprep.subr.mxu0 0.0
        %630 = vmatpush1.msra.mxu0 0.0
        %631 = vmatprep.subr.mxu0 0.0
        %632 = vmatpush1.msra.mxu0 0.0
        %633 = vmatprep.subr.mxu0 0.0
        %634 = vmatpush1.msra.mxu0 0.0
        %635 = vmatprep.subr.mxu0 0.0
        %636 = vmatpush1.msra.mxu0 0.0
        %637 = vmatprep.subr.mxu0 0.0
        %638 = vmatpush1.msra.mxu0 0.0
        %639 = vmatprep.subr.mxu0 0.0
        %640 = vmatpush1.msra.mxu0 0.0
        %641 = vmatprep.subr.mxu0 0.0
        %642 = vmatpush1.msra.mxu0 0.0
        %643 = vmatprep.subr.mxu0 0.0
        %644 = vmatpush1.msra.mxu0 0.0
        %645 = vmatprep.subr.mxu0 0.0
        %646 = vmatpush1.msra.mxu0 0.0
        %647 = vmatprep.subr.mxu0 0.0
        %648 = vmatpush1.msra.mxu0 0.0
        %649 = vmatprep.subr.mxu0 0.0
        %650 = vmatpush1.msra.mxu0 0.0
        %651 = vmatprep.subr.mxu0 0.0
        %652 = vmatpush1.msra.mxu0 0.0
        %653 = vmatprep.subr.mxu0 0.0
        %654 = vmatpush1.msra.mxu0 0.0
        %655 = vmatprep.subr.mxu0 0.0
        %656 = vmatpush1.msra.mxu0 0.0
        %657 = vmatprep.subr.mxu0 0.0
        %658 = vmatpush1.msra.mxu0 0.0
        %659 = vmatprep.subr.mxu0 0.0
        %660 = vmatpush1.msra.mxu0 0.0
        %661 = vmatprep.subr.mxu0 0.0
        %662 = vmatpush1.msra.mxu0 0.0
        %663 = vmatprep.subr.mxu0 0.0
        %664 = vmatpush1.msra.mxu0 0.0
        %665 = vmatprep.subr.mxu0 0.0
        %666 = vmatpush1.msra.mxu0 0.0
        %667 = vmatprep.subr.mxu0 0.0
        %668 = vmatpush1.msra.mxu0 0.0
        %669 = vmatprep.subr.mxu0 0.0
        %670 = vmatpush1.msra.mxu0 0.0
        %671 = vmatprep.subr.mxu0 0.0
        %672 = vmatpush1.msra.mxu0 0.0
        %673 = vmatprep.subr.mxu0 0.0
        %674 = vmatpush1.msra.mxu0 0.0
        %675 = vmatprep.subr.mxu0 0.0
        %676 = vmatpush1.msra.mxu0 0.0
        %677 = vmatprep.subr.mxu0 0.0
        %678 = vmatpush1.msra.mxu0 0.0
        %679 = vmatprep.subr.mxu0 0.0
        %680 = vmatpush1.msra.mxu0 0.0
        %681 = vmatprep.mubr.f32.mxu0 0.0
        %682 = vmatmul.mubr.f32.gmra.mrb[0].mxu0 %v615
        %v683 = vpop.f32.mrb[0].mxu0
        %v684 = vadd.f32 0.0, %v683
        %v685 = vpop.f32.mrb[0].mxu0
        %686 = vdwg.mxu0
        %v687 = vsel %vm470, %v419, 0
        %689 = vmatprep.subr.mxu0 0.0
        %690 = vmatpush1.msra.mxu0 %v318
        %691 = vmatprep.subr.mxu0 0.0
        %692 = vmatpush1.msra.mxu0 %v319
        %693 = vmatprep.subr.mxu0 0.0
        %694 = vmatpush1.msra.mxu0 %v320
        %695 = vmatprep.subr.mxu0 0.0
        %696 = vmatpush1.msra.mxu0 %v321
        %697 = vmatprep.subr.mxu0 0.0
        %698 = vmatpush1.msra.mxu0 0.0
        %699 = vmatprep.subr.mxu0 0.0
        %700 = vmatpush1.msra.mxu0 0.0
        %701 = vmatprep.subr.mxu0 0.0
        %702 = vmatpush1.msra.mxu0 0.0
        %703 = vmatprep.subr.mxu0 0.0
        %704 = vmatpush1.msra.mxu0 0.0
        %705 = vmatprep.subr.mxu0 0.0
        %706 = vmatpush1.msra.mxu0 0.0
        %707 = vmatprep.subr.mxu0 0.0
        %708 = vmatpush1.msra.mxu0 0.0
        %709 = vmatprep.subr.mxu0 0.0
        %710 = vmatpush1.msra.mxu0 0.0
        %711 = vmatprep.subr.mxu0 0.0
        %712 = vmatpush1.msra.mxu0 0.0
        %713 = vmatprep.subr.mxu0 0.0
        %714 = vmatpush1.msra.mxu0 0.0
        %715 = vmatprep.subr.mxu0 0.0
        %716 = vmatpush1.msra.mxu0 0.0
        %717 = vmatprep.subr.mxu0 0.0
        %718 = vmatpush1.msra.mxu0 0.0
        %719 = vmatprep.subr.mxu0 0.0
        %720 = vmatpush1.msra.mxu0 0.0
        %721 = vmatprep.subr.mxu0 0.0
        %722 = vmatpush1.msra.mxu0 0.0
        %723 = vmatprep.subr.mxu0 0.0
        %724 = vmatpush1.msra.mxu0 0.0
        %725 = vmatprep.subr.mxu0 0.0
        %726 = vmatpush1.msra.mxu0 0.0
        %727 = vmatprep.subr.mxu0 0.0
        %728 = vmatpush1.msra.mxu0 0.0
        %729 = vmatprep.subr.mxu0 0.0
        %730 = vmatpush1.msra.mxu0 0.0
        %731 = vmatprep.subr.mxu0 0.0
        %732 = vmatpush1.msra.mxu0 0.0
        %733 = vmatprep.subr.mxu0 0.0
        %734 = vmatpush1.msra.mxu0 0.0
        %735 = vmatprep.subr.mxu0 0.0
        %736 = vmatpush1.msra.mxu0 0.0
        %737 = vmatprep.subr.mxu0 0.0
        %738 = vmatpush1.msra.mxu0 0.0
        %739 = vmatprep.subr.mxu0 0.0
        %740 = vmatpush1.msra.mxu0 0.0
        %741 = vmatprep.subr.mxu0 0.0
        %742 = vmatpush1.msra.mxu0 0.0
        %743 = vmatprep.subr.mxu0 0.0
        %744 = vmatpush1.msra.mxu0 0.0
        %745 = vmatprep.subr.mxu0 0.0
        %746 = vmatpush1.msra.mxu0 0.0
        %747 = vmatprep.subr.mxu0 0.0
        %748 = vmatpush1.msra.mxu0 0.0
        %749 = vmatprep.subr.mxu0 0.0
        %750 = vmatpush1.msra.mxu0 0.0
        %751 = vmatprep.subr.mxu0 0.0
        %752 = vmatpush1.msra.mxu0 0.0
        %753 = vmatprep.mubr.f32.mxu0 0.0
        %754 = vmatmul.mubr.f32.gmra.mrb[0].mxu0 %v687
        %v755 = vpop.f32.mrb[0].mxu0
        %v756 = vadd.f32 0.0, %v755
        %v757 = vpop.f32.mrb[0].mxu0
        %758 = vdwg.mxu0
        %v759 = vsel %vm470, %v402, 0
        %761 = vmatprep.subr.mxu0 0.0
        %762 = vmatpush1.msra.mxu0 %v322
        %763 = vmatprep.subr.mxu0 0.0
        %764 = vmatpush1.msra.mxu0 %v323
        %765 = vmatprep.subr.mxu0 0.0
        %766 = vmatpush1.msra.mxu0 %v324
        %767 = vmatprep.subr.mxu0 0.0
        %768 = vmatpush1.msra.mxu0 %v325
        %769 = vmatprep.subr.mxu0 0.0
        %770 = vmatpush1.msra.mxu0 0.0
        %771 = vmatprep.subr.mxu0 0.0
        %772 = vmatpush1.msra.mxu0 0.0
        %773 = vmatprep.subr.mxu0 0.0
        %774 = vmatpush1.msra.mxu0 0.0
        %775 = vmatprep.subr.mxu0 0.0
        %776 = vmatpush1.msra.mxu0 0.0
        %777 = vmatprep.subr.mxu0 0.0
        %778 = vmatpush1.msra.mxu0 0.0
        %779 = vmatprep.subr.mxu0 0.0
        %780 = vmatpush1.msra.mxu0 0.0
        %781 = vmatprep.subr.mxu0 0.0
        %782 = vmatpush1.msra.mxu0 0.0
        %783 = vmatprep.subr.mxu0 0.0
        %784 = vmatpush1.msra.mxu0 0.0
        %785 = vmatprep.subr.mxu0 0.0
        %786 = vmatpush1.msra.mxu0 0.0
        %787 = vmatprep.subr.mxu0 0.0
        %788 = vmatpush1.msra.mxu0 0.0
        %789 = vmatprep.subr.mxu0 0.0
        %790 = vmatpush1.msra.mxu0 0.0
        %791 = vmatprep.subr.mxu0 0.0
        %792 = vmatpush1.msra.mxu0 0.0
        %793 = vmatprep.subr.mxu0 0.0
        %794 = vmatpush1.msra.mxu0 0.0
        %795 = vmatprep.subr.mxu0 0.0
        %796 = vmatpush1.msra.mxu0 0.0
        %797 = vmatprep.subr.mxu0 0.0
        %798 = vmatpush1.msra.mxu0 0.0
        %799 = vmatprep.subr.mxu0 0.0
        %800 = vmatpush1.msra.mxu0 0.0
        %801 = vmatprep.subr.mxu0 0.0
        %802 = vmatpush1.msra.mxu0 0.0
        %803 = vmatprep.subr.mxu0 0.0
        %804 = vmatpush1.msra.mxu0 0.0
        %805 = vmatprep.subr.mxu0 0.0
        %806 = vmatpush1.msra.mxu0 0.0
        %807 = vmatprep.subr.mxu0 0.0
        %808 = vmatpush1.msra.mxu0 0.0
        %809 = vmatprep.subr.mxu0 0.0
        %810 = vmatpush1.msra.mxu0 0.0
        %811 = vmatprep.subr.mxu0 0.0
        %812 = vmatpush1.msra.mxu0 0.0
        %813 = vmatprep.subr.mxu0 0.0
        %814 = vmatpush1.msra.mxu0 0.0
        %815 = vmatprep.subr.mxu0 0.0
        %816 = vmatpush1.msra.mxu0 0.0
        %817 = vmatprep.subr.mxu0 0.0
        %818 = vmatpush1.msra.mxu0 0.0
        %819 = vmatprep.subr.mxu0 0.0
        %820 = vmatpush1.msra.mxu0 0.0
        %821 = vmatprep.subr.mxu0 0.0
        %822 = vmatpush1.msra.mxu0 0.0
        %823 = vmatprep.subr.mxu0 0.0
        %824 = vmatpush1.msra.mxu0 0.0
        %825 = vmatprep.mubr.f32.mxu0 0.0
        %826 = vmatmul.mubr.f32.gmra.mrb[0].mxu0 %v759
        %v827 = vpop.f32.mrb[0].mxu0
        %v828 = vadd.f32 0.0, %v827
        %v829 = vpop.f32.mrb[0].mxu0
        %830 = vdwg.mxu0
        %v831 = vsel %vm470, %v416, 0
        %833 = vmatprep.subr.mxu0 0.0
        %834 = vmatpush1.msra.mxu0 %v326
        %835 = vmatprep.subr.mxu0 0.0
        %836 = vmatpush1.msra.mxu0 %v327
        %837 = vmatprep.subr.mxu0 0.0
        %838 = vmatpush1.msra.mxu0 %v328
        %839 = vmatprep.subr.mxu0 0.0
        %840 = vmatpush1.msra.mxu0 %v329
        %841 = vmatprep.subr.mxu0 0.0
        %842 = vmatpush1.msra.mxu0 0.0
        %843 = vmatprep.subr.mxu0 0.0
        %844 = vmatpush1.msra.mxu0 0.0
        %845 = vmatprep.subr.mxu0 0.0
        %846 = vmatpush1.msra.mxu0 0.0
        %847 = vmatprep.subr.mxu0 0.0
        %848 = vmatpush1.msra.mxu0 0.0
        %849 = vmatprep.subr.mxu0 0.0
        %850 = vmatpush1.msra.mxu0 0.0
        %851 = vmatprep.subr.mxu0 0.0
        %852 = vmatpush1.msra.mxu0 0.0
        %853 = vmatprep.subr.mxu0 0.0
        %854 = vmatpush1.msra.mxu0 0.0
        %855 = vmatprep.subr.mxu0 0.0
        %856 = vmatpush1.msra.mxu0 0.0
        %857 = vmatprep.subr.mxu0 0.0
        %858 = vmatpush1.msra.mxu0 0.0
        %859 = vmatprep.subr.mxu0 0.0
        %860 = vmatpush1.msra.mxu0 0.0
        %861 = vmatprep.subr.mxu0 0.0
        %862 = vmatpush1.msra.mxu0 0.0
        %863 = vmatprep.subr.mxu0 0.0
        %864 = vmatpush1.msra.mxu0 0.0
        %865 = vmatprep.subr.mxu0 0.0
        %866 = vmatpush1.msra.mxu0 0.0
        %867 = vmatprep.subr.mxu0 0.0
        %868 = vmatpush1.msra.mxu0 0.0
        %869 = vmatprep.subr.mxu0 0.0
        %870 = vmatpush1.msra.mxu0 0.0
        %871 = vmatprep.subr.mxu0 0.0
        %872 = vmatpush1.msra.mxu0 0.0
        %873 = vmatprep.subr.mxu0 0.0
        %874 = vmatpush1.msra.mxu0 0.0
        %875 = vmatprep.subr.mxu0 0.0
        %876 = vmatpush1.msra.mxu0 0.0
        %877 = vmatprep.subr.mxu0 0.0
        %878 = vmatpush1.msra.mxu0 0.0
        %879 = vmatprep.subr.mxu0 0.0
        %880 = vmatpush1.msra.mxu0 0.0
        %881 = vmatprep.subr.mxu0 0.0
        %882 = vmatpush1.msra.mxu0 0.0
        %883 = vmatprep.subr.mxu0 0.0
        %884 = vmatpush1.msra.mxu0 0.0
        %885 = vmatprep.subr.mxu0 0.0
        %886 = vmatpush1.msra.mxu0 0.0
        %887 = vmatprep.subr.mxu0 0.0
        %888 = vmatpush1.msra.mxu0 0.0
        %889 = vmatprep.subr.mxu0 0.0
        %890 = vmatpush1.msra.mxu0 0.0
        %891 = vmatprep.subr.mxu0 0.0
        %892 = vmatpush1.msra.mxu0 0.0
        %893 = vmatprep.subr.mxu0 0.0
        %894 = vmatpush1.msra.mxu0 0.0
        %895 = vmatprep.subr.mxu0 0.0
        %896 = vmatpush1.msra.mxu0 0.0
        %897 = vmatprep.mubr.f32.mxu0 0.0
        %898 = vmatmul.mubr.f32.gmra.mrb[0].mxu0 %v831
        %v899 = vpop.f32.mrb[0].mxu0
        %v900 = vadd.f32 0.0, %v899
        %v901 = vpop.f32.mrb[0].mxu0
        %902 = vdwg.mxu0
        %v903 = vsel %vm470, %v418, 0
        %905 = vmatprep.subr.mxu0 0.0
        %906 = vmatpush1.msra.mxu0 %v330
        %907 = vmatprep.subr.mxu0 0.0
        %908 = vmatpush1.msra.mxu0 %v331
        %909 = vmatprep.subr.mxu0 0.0
        %910 = vmatpush1.msra.mxu0 %v332
        %911 = vmatprep.subr.mxu0 0.0
        %912 = vmatpush1.msra.mxu0 %v333
        %913 = vmatprep.subr.mxu0 0.0
        %914 = vmatpush1.msra.mxu0 0.0
        %915 = vmatprep.subr.mxu0 0.0
        %916 = vmatpush1.msra.mxu0 0.0
        %917 = vmatprep.subr.mxu0 0.0
        %918 = vmatpush1.msra.mxu0 0.0
        %919 = vmatprep.subr.mxu0 0.0
        %920 = vmatpush1.msra.mxu0 0.0
        %921 = vmatprep.subr.mxu0 0.0
        %922 = vmatpush1.msra.mxu0 0.0
        %923 = vmatprep.subr.mxu0 0.0
        %924 = vmatpush1.msra.mxu0 0.0
        %925 = vmatprep.subr.mxu0 0.0
        %926 = vmatpush1.msra.mxu0 0.0
        %927 = vmatprep.subr.mxu0 0.0
        %928 = vmatpush1.msra.mxu0 0.0
        %929 = vmatprep.subr.mxu0 0.0
        %930 = vmatpush1.msra.mxu0 0.0
        %931 = vmatprep.subr.mxu0 0.0
        %932 = vmatpush1.msra.mxu0 0.0
        %933 = vmatprep.subr.mxu0 0.0
        %934 = vmatpush1.msra.mxu0 0.0
        %935 = vmatprep.subr.mxu0 0.0
        %936 = vmatpush1.msra.mxu0 0.0
        %937 = vmatprep.subr.mxu0 0.0
        %938 = vmatpush1.msra.mxu0 0.0
        %939 = vmatprep.subr.mxu0 0.0
        %940 = vmatpush1.msra.mxu0 0.0
        %941 = vmatprep.subr.mxu0 0.0
        %942 = vmatpush1.msra.mxu0 0.0
        %943 = vmatprep.subr.mxu0 0.0
        %944 = vmatpush1.msra.mxu0 0.0
        %945 = vmatprep.subr.mxu0 0.0
        %946 = vmatpush1.msra.mxu0 0.0
        %947 = vmatprep.subr.mxu0 0.0
        %948 = vmatpush1.msra.mxu0 0.0
        %949 = vmatprep.subr.mxu0 0.0
        %950 = vmatpush1.msra.mxu0 0.0
        %951 = vmatprep.subr.mxu0 0.0
        %952 = vmatpush1.msra.mxu0 0.0
        %953 = vmatprep.subr.mxu0 0.0
        %954 = vmatpush1.msra.mxu0 0.0
        %955 = vmatprep.subr.mxu0 0.0
        %956 = vmatpush1.msra.mxu0 0.0
        %957 = vmatprep.subr.mxu0 0.0
        %958 = vmatpush1.msra.mxu0 0.0
        %959 = vmatprep.subr.mxu0 0.0
        %960 = vmatpush1.msra.mxu0 0.0
        %961 = vmatprep.subr.mxu0 0.0
        %962 = vmatpush1.msra.mxu0 0.0
        %963 = vmatprep.subr.mxu0 0.0
        %964 = vmatpush1.msra.mxu0 0.0
        %965 = vmatprep.subr.mxu0 0.0
        %966 = vmatpush1.msra.mxu0 0.0
        %967 = vmatprep.subr.mxu0 0.0
        %968 = vmatpush1.msra.mxu0 0.0
        %969 = vmatprep.mubr.f32.mxu0 0.0
        %970 = vmatmul.mubr.f32.gmra.mrb[0].mxu0 %v903
        %v971 = vpop.f32.mrb[0].mxu0
        %v972 = vadd.f32 0.0, %v971
        %v973 = vpop.f32.mrb[0].mxu0
        %974 = vdwg.mxu0
        %v975 = vsel %vm470, %v420, 0
        %977 = vmatprep.subr.mxu0 0.0
        %978 = vmatpush1.msra.mxu0 %v334
        %979 = vmatprep.subr.mxu0 0.0
        %980 = vmatpush1.msra.mxu0 %v335
        %981 = vmatprep.subr.mxu0 0.0
        %982 = vmatpush1.msra.mxu0 %v336
        %983 = vmatprep.subr.mxu0 0.0
        %984 = vmatpush1.msra.mxu0 %v337
        %985 = vmatprep.subr.mxu0 0.0
        %986 = vmatpush1.msra.mxu0 0.0
        %987 = vmatprep.subr.mxu0 0.0
        %988 = vmatpush1.msra.mxu0 0.0
        %989 = vmatprep.subr.mxu0 0.0
        %990 = vmatpush1.msra.mxu0 0.0
        %991 = vmatprep.subr.mxu0 0.0
        %992 = vmatpush1.msra.mxu0 0.0
        %993 = vmatprep.subr.mxu0 0.0
        %994 = vmatpush1.msra.mxu0 0.0
        %995 = vmatprep.subr.mxu0 0.0
        %996 = vmatpush1.msra.mxu0 0.0
        %997 = vmatprep.subr.mxu0 0.0
        %998 = vmatpush1.msra.mxu0 0.0
        %999 = vmatprep.subr.mxu0 0.0
        %1000 = vmatpush1.msra.mxu0 0.0
        %1001 = vmatprep.subr.mxu0 0.0
        %1002 = vmatpush1.msra.mxu0 0.0
        %1003 = vmatprep.subr.mxu0 0.0
        %1004 = vmatpush1.msra.mxu0 0.0
        %1005 = vmatprep.subr.mxu0 0.0
        %1006 = vmatpush1.msra.mxu0 0.0
        %1007 = vmatprep.subr.mxu0 0.0
        %1008 = vmatpush1.msra.mxu0 0.0
        %1009 = vmatprep.subr.mxu0 0.0
        %1010 = vmatpush1.msra.mxu0 0.0
        %1011 = vmatprep.subr.mxu0 0.0
        %1012 = vmatpush1.msra.mxu0 0.0
        %1013 = vmatprep.subr.mxu0 0.0
        %1014 = vmatpush1.msra.mxu0 0.0
        %1015 = vmatprep.subr.mxu0 0.0
        %1016 = vmatpush1.msra.mxu0 0.0
        %1017 = vmatprep.subr.mxu0 0.0
        %1018 = vmatpush1.msra.mxu0 0.0
        %1019 = vmatprep.subr.mxu0 0.0
        %1020 = vmatpush1.msra.mxu0 0.0
        %1021 = vmatprep.subr.mxu0 0.0
        %1022 = vmatpush1.msra.mxu0 0.0
        %1023 = vmatprep.subr.mxu0 0.0
        %1024 = vmatpush1.msra.mxu0 0.0
        %1025 = vmatprep.subr.mxu0 0.0
        %1026 = vmatpush1.msra.mxu0 0.0
        %1027 = vmatprep.subr.mxu0 0.0
        %1028 = vmatpush1.msra.mxu0 0.0
        %1029 = vmatprep.subr.mxu0 0.0
        %1030 = vmatpush1.msra.mxu0 0.0
        %1031 = vmatprep.subr.mxu0 0.0
        %1032 = vmatpush1.msra.mxu0 0.0
        %1033 = vmatprep.subr.mxu0 0.0
        %1034 = vmatpush1.msra.mxu0 0.0
        %1035 = vmatprep.subr.mxu0 0.0
        %1036 = vmatpush1.msra.mxu0 0.0
        %1037 = vmatprep.subr.mxu0 0.0
        %1038 = vmatpush1.msra.mxu0 0.0
        %1039 = vmatprep.subr.mxu0 0.0
        %1040 = vmatpush1.msra.mxu0 0.0
        %1041 = vmatprep.mubr.f32.mxu0 0.0
        %1042 = vmatmul.mubr.f32.gmra.mrb[0].mxu0 %v975
        %v1043 = vpop.f32.mrb[0].mxu0
        %v1044 = vadd.f32 0.0, %v1043
        %v1045 = vpop.f32.mrb[0].mxu0
        %1046 = vdwg.mxu0
        %v1047 = vsel %vm470, %v444, 0
        %1049 = vmatprep.subr.mxu0 0.0
        %1050 = vmatpush1.msra.mxu0 %v338
        %1051 = vmatprep.subr.mxu0 0.0
        %1052 = vmatpush1.msra.mxu0 %v339
        %1053 = vmatprep.subr.mxu0 0.0
        %1054 = vmatpush1.msra.mxu0 %v340
        %1055 = vmatprep.subr.mxu0 0.0
        %1056 = vmatpush1.msra.mxu0 %v341
        %1057 = vmatprep.subr.mxu0 0.0
        %1058 = vmatpush1.msra.mxu0 0.0
        %1059 = vmatprep.subr.mxu0 0.0
        %1060 = vmatpush1.msra.mxu0 0.0
        %1061 = vmatprep.subr.mxu0 0.0
        %1062 = vmatpush1.msra.mxu0 0.0
        %1063 = vmatprep.subr.mxu0 0.0
        %1064 = vmatpush1.msra.mxu0 0.0
        %1065 = vmatprep.subr.mxu0 0.0
        %1066 = vmatpush1.msra.mxu0 0.0
        %1067 = vmatprep.subr.mxu0 0.0
        %1068 = vmatpush1.msra.mxu0 0.0
        %1069 = vmatprep.subr.mxu0 0.0
        %1070 = vmatpush1.msra.mxu0 0.0
        %1071 = vmatprep.subr.mxu0 0.0
        %1072 = vmatpush1.msra.mxu0 0.0
        %1073 = vmatprep.subr.mxu0 0.0
        %1074 = vmatpush1.msra.mxu0 0.0
        %1075 = vmatprep.subr.mxu0 0.0
        %1076 = vmatpush1.msra.mxu0 0.0
        %1077 = vmatprep.subr.mxu0 0.0
        %1078 = vmatpush1.msra.mxu0 0.0
        %1079 = vmatprep.subr.mxu0 0.0
        %1080 = vmatpush1.msra.mxu0 0.0
        %1081 = vmatprep.subr.mxu0 0.0
        %1082 = vmatpush1.msra.mxu0 0.0
        %1083 = vmatprep.subr.mxu0 0.0
        %1084 = vmatpush1.msra.mxu0 0.0
        %1085 = vmatprep.subr.mxu0 0.0
        %1086 = vmatpush1.msra.mxu0 0.0
        %1087 = vmatprep.subr.mxu0 0.0
        %1088 = vmatpush1.msra.mxu0 0.0
        %1089 = vmatprep.subr.mxu0 0.0
        %1090 = vmatpush1.msra.mxu0 0.0
        %1091 = vmatprep.subr.mxu0 0.0
        %1092 = vmatpush1.msra.mxu0 0.0
        %1093 = vmatprep.subr.mxu0 0.0
        %1094 = vmatpush1.msra.mxu0 0.0
        %1095 = vmatprep.subr.mxu0 0.0
        %1096 = vmatpush1.msra.mxu0 0.0
        %1097 = vmatprep.subr.mxu0 0.0
        %1098 = vmatpush1.msra.mxu0 0.0
        %1099 = vmatprep.subr.mxu0 0.0
        %1100 = vmatpush1.msra.mxu0 0.0
        %1101 = vmatprep.subr.mxu0 0.0
        %1102 = vmatpush1.msra.mxu0 0.0
        %1103 = vmatprep.subr.mxu0 0.0
        %1104 = vmatpush1.msra.mxu0 0.0
        %1105 = vmatprep.subr.mxu0 0.0
        %1106 = vmatpush1.msra.mxu0 0.0
        %1107 = vmatprep.subr.mxu0 0.0
        %1108 = vmatpush1.msra.mxu0 0.0
        %1109 = vmatprep.subr.mxu0 0.0
        %1110 = vmatpush1.msra.mxu0 0.0
        %1111 = vmatprep.subr.mxu0 0.0
        %1112 = vmatpush1.msra.mxu0 0.0
        %1113 = vmatprep.mubr.f32.mxu0 0.0
        %1114 = vmatmul.mubr.f32.gmra.mrb[0].mxu0 %v1047
        %v1115 = vpop.f32.mrb[0].mxu0
        %v1116 = vadd.f32 0.0, %v1115
        %v1117 = vpop.f32.mrb[0].mxu0
        %1118 = vdwg.mxu0
        %v1119 = vsel %vm470, %v458, 0
        %1121 = vmatprep.subr.mxu0 0.0
        %1122 = vmatpush1.msra.mxu0 %v342
        %1123 = vmatprep.subr.mxu0 0.0
        %1124 = vmatpush1.msra.mxu0 %v343
        %1125 = vmatprep.subr.mxu0 0.0
        %1126 = vmatpush1.msra.mxu0 %v344
        %1127 = vmatprep.subr.mxu0 0.0
        %1128 = vmatpush1.msra.mxu0 %v345
        %1129 = vmatprep.subr.mxu0 0.0
        %1130 = vmatpush1.msra.mxu0 0.0
        %1131 = vmatprep.subr.mxu0 0.0
        %1132 = vmatpush1.msra.mxu0 0.0
        %1133 = vmatprep.subr.mxu0 0.0
        %1134 = vmatpush1.msra.mxu0 0.0
        %1135 = vmatprep.subr.mxu0 0.0
        %1136 = vmatpush1.msra.mxu0 0.0
        %1137 = vmatprep.subr.mxu0 0.0
        %1138 = vmatpush1.msra.mxu0 0.0
        %1139 = vmatprep.subr.mxu0 0.0
        %1140 = vmatpush1.msra.mxu0 0.0
        %1141 = vmatprep.subr.mxu0 0.0
        %1142 = vmatpush1.msra.mxu0 0.0
        %1143 = vmatprep.subr.mxu0 0.0
        %1144 = vmatpush1.msra.mxu0 0.0
        %1145 = vmatprep.subr.mxu0 0.0
        %1146 = vmatpush1.msra.mxu0 0.0
        %1147 = vmatprep.subr.mxu0 0.0
        %1148 = vmatpush1.msra.mxu0 0.0
        %1149 = vmatprep.subr.mxu0 0.0
        %1150 = vmatpush1.msra.mxu0 0.0
        %1151 = vmatprep.subr.mxu0 0.0
        %1152 = vmatpush1.msra.mxu0 0.0
        %1153 = vmatprep.subr.mxu0 0.0
        %1154 = vmatpush1.msra.mxu0 0.0
        %1155 = vmatprep.subr.mxu0 0.0
        %1156 = vmatpush1.msra.mxu0 0.0
        %1157 = vmatprep.subr.mxu0 0.0
        %1158 = vmatpush1.msra.mxu0 0.0
        %1159 = vmatprep.subr.mxu0 0.0
        %1160 = vmatpush1.msra.mxu0 0.0
        %1161 = vmatprep.subr.mxu0 0.0
        %1162 = vmatpush1.msra.mxu0 0.0
        %1163 = vmatprep.subr.mxu0 0.0
        %1164 = vmatpush1.msra.mxu0 0.0
        %1165 = vmatprep.subr.mxu0 0.0
        %1166 = vmatpush1.msra.mxu0 0.0
        %1167 = vmatprep.subr.mxu0 0.0
        %1168 = vmatpush1.msra.mxu0 0.0
        %1169 = vmatprep.subr.mxu0 0.0
        %1170 = vmatpush1.msra.mxu0 0.0
        %1171 = vmatprep.subr.mxu0 0.0
        %1172 = vmatpush1.msra.mxu0 0.0
        %1173 = vmatprep.subr.mxu0 0.0
        %1174 = vmatpush1.msra.mxu0 0.0
        %1175 = vmatprep.subr.mxu0 0.0
        %1176 = vmatpush1.msra.mxu0 0.0
        %1177 = vmatprep.subr.mxu0 0.0
        %1178 = vmatpush1.msra.mxu0 0.0
        %1179 = vmatprep.subr.mxu0 0.0
        %1180 = vmatpush1.msra.mxu0 0.0
        %1181 = vmatprep.subr.mxu0 0.0
        %1182 = vmatpush1.msra.mxu0 0.0
        %1183 = vmatprep.subr.mxu0 0.0
        %1184 = vmatpush1.msra.mxu0 0.0
        %1185 = vmatprep.mubr.f32.mxu0 0.0
        %1186 = vmatmul.mubr.f32.gmra.mrb[0].mxu0 %v1119
        %v1187 = vpop.f32.mrb[0].mxu0
        %v1188 = vadd.f32 0.0, %v1187
        %v1189 = vpop.f32.mrb[0].mxu0
        %1190 = vdwg.mxu0
        %v1191 = vsel %vm470, %v466, 0
        %1193 = vmatprep.subr.mxu0 0.0
        %1194 = vmatpush1.msra.mxu0 %v346
        %1195 = vmatprep.subr.mxu0 0.0
        %1196 = vmatpush1.msra.mxu0 %v347
        %1197 = vmatprep.subr.mxu0 0.0
        %1198 = vmatpush1.msra.mxu0 %v348
        %1199 = vmatprep.subr.mxu0 0.0
        %1200 = vmatpush1.msra.mxu0 %v349
        %1201 = vmatprep.subr.mxu0 0.0
        %1202 = vmatpush1.msra.mxu0 0.0
        %1203 = vmatprep.subr.mxu0 0.0
        %1204 = vmatpush1.msra.mxu0 0.0
        %1205 = vmatprep.subr.mxu0 0.0
        %1206 = vmatpush1.msra.mxu0 0.0
        %1207 = vmatprep.subr.mxu0 0.0
        %1208 = vmatpush1.msra.mxu0 0.0
        %1209 = vmatprep.subr.mxu0 0.0
        %1210 = vmatpush1.msra.mxu0 0.0
        %1211 = vmatprep.subr.mxu0 0.0
        %1212 = vmatpush1.msra.mxu0 0.0
        %1213 = vmatprep.subr.mxu0 0.0
        %1214 = vmatpush1.msra.mxu0 0.0
        %1215 = vmatprep.subr.mxu0 0.0
        %1216 = vmatpush1.msra.mxu0 0.0
        %1217 = vmatprep.subr.mxu0 0.0
        %1218 = vmatpush1.msra.mxu0 0.0
        %1219 = vmatprep.subr.mxu0 0.0
        %1220 = vmatpush1.msra.mxu0 0.0
        %1221 = vmatprep.subr.mxu0 0.0
        %1222 = vmatpush1.msra.mxu0 0.0
        %1223 = vmatprep.subr.mxu0 0.0
        %1224 = vmatpush1.msra.mxu0 0.0
        %1225 = vmatprep.subr.mxu0 0.0
        %1226 = vmatpush1.msra.mxu0 0.0
        %1227 = vmatprep.subr.mxu0 0.0
        %1228 = vmatpush1.msra.mxu0 0.0
        %1229 = vmatprep.subr.mxu0 0.0
        %1230 = vmatpush1.msra.mxu0 0.0
        %1231 = vmatprep.subr.mxu0 0.0
        %1232 = vmatpush1.msra.mxu0 0.0
        %1233 = vmatprep.subr.mxu0 0.0
        %1234 = vmatpush1.msra.mxu0 0.0
        %1235 = vmatprep.subr.mxu0 0.0
        %1236 = vmatpush1.msra.mxu0 0.0
        %1237 = vmatprep.subr.mxu0 0.0
        %1238 = vmatpush1.msra.mxu0 0.0
        %1239 = vmatprep.subr.mxu0 0.0
        %1240 = vmatpush1.msra.mxu0 0.0
        %1241 = vmatprep.subr.mxu0 0.0
        %1242 = vmatpush1.msra.mxu0 0.0
        %1243 = vmatprep.subr.mxu0 0.0
        %1244 = vmatpush1.msra.mxu0 0.0
        %1245 = vmatprep.subr.mxu0 0.0
        %1246 = vmatpush1.msra.mxu0 0.0
        %1247 = vmatprep.subr.mxu0 0.0
        %1248 = vmatpush1.msra.mxu0 0.0
        %1249 = vmatprep.subr.mxu0 0.0
        %1250 = vmatpush1.msra.mxu0 0.0
        %1251 = vmatprep.subr.mxu0 0.0
        %1252 = vmatpush1.msra.mxu0 0.0
        %1253 = vmatprep.subr.mxu0 0.0
        %1254 = vmatpush1.msra.mxu0 0.0
        %1255 = vmatprep.subr.mxu0 0.0
        %1256 = vmatpush1.msra.mxu0 0.0
        %1257 = vmatprep.mubr.f32.mxu0 0.0
        %1258 = vmatmul.mubr.f32.gmra.mrb[0].mxu0 %v1191
        %v1259 = vpop.f32.mrb[0].mxu0
        %v1260 = vadd.f32 0.0, %v1259
        %v1261 = vpop.f32.mrb[0].mxu0
        %1262 = vdwg.mxu0
        %v1263 = vsel %vm470, %v468, 0
        %1265 = vmatprep.subr.mxu0 0.0
        %1266 = vmatpush1.msra.mxu0 %v350
        %1267 = vmatprep.subr.mxu0 0.0
        %1268 = vmatpush1.msra.mxu0 %v351
        %1269 = vmatprep.subr.mxu0 0.0
        %1270 = vmatpush1.msra.mxu0 %v352
        %1271 = vmatprep.subr.mxu0 0.0
        %1272 = vmatpush1.msra.mxu0 %v353
        %1273 = vmatprep.subr.mxu0 0.0
        %1274 = vmatpush1.msra.mxu0 0.0
        %1275 = vmatprep.subr.mxu0 0.0
        %1276 = vmatpush1.msra.mxu0 0.0
        %1277 = vmatprep.subr.mxu0 0.0
        %1278 = vmatpush1.msra.mxu0 0.0
        %1279 = vmatprep.subr.mxu0 0.0
        %1280 = vmatpush1.msra.mxu0 0.0
        %1281 = vmatprep.subr.mxu0 0.0
        %1282 = vmatpush1.msra.mxu0 0.0
        %1283 = vmatprep.subr.mxu0 0.0
        %1284 = vmatpush1.msra.mxu0 0.0
        %1285 = vmatprep.subr.mxu0 0.0
        %1286 = vmatpush1.msra.mxu0 0.0
        %1287 = vmatprep.subr.mxu0 0.0
        %1288 = vmatpush1.msra.mxu0 0.0
        %1289 = vmatprep.subr.mxu0 0.0
        %1290 = vmatpush1.msra.mxu0 0.0
        %1291 = vmatprep.subr.mxu0 0.0
        %1292 = vmatpush1.msra.mxu0 0.0
        %1293 = vmatprep.subr.mxu0 0.0
        %1294 = vmatpush1.msra.mxu0 0.0
        %1295 = vmatprep.subr.mxu0 0.0
        %1296 = vmatpush1.msra.mxu0 0.0
        %1297 = vmatprep.subr.mxu0 0.0
        %1298 = vmatpush1.msra.mxu0 0.0
        %1299 = vmatprep.subr.mxu0 0.0
        %1300 = vmatpush1.msra.mxu0 0.0
        %1301 = vmatprep.subr.mxu0 0.0
        %1302 = vmatpush1.msra.mxu0 0.0
        %1303 = vmatprep.subr.mxu0 0.0
        %1304 = vmatpush1.msra.mxu0 0.0
        %1305 = vmatprep.subr.mxu0 0.0
        %1306 = vmatpush1.msra.mxu0 0.0
        %1307 = vmatprep.subr.mxu0 0.0
        %1308 = vmatpush1.msra.mxu0 0.0
        %1309 = vmatprep.subr.mxu0 0.0
        %1310 = vmatpush1.msra.mxu0 0.0
        %1311 = vmatprep.subr.mxu0 0.0
        %1312 = vmatpush1.msra.mxu0 0.0
        %1313 = vmatprep.subr.mxu0 0.0
        %1314 = vmatpush1.msra.mxu0 0.0
        %1315 = vmatprep.subr.mxu0 0.0
        %1316 = vmatpush1.msra.mxu0 0.0
        %1317 = vmatprep.subr.mxu0 0.0
        %1318 = vmatpush1.msra.mxu0 0.0
        %1319 = vmatprep.subr.mxu0 0.0
        %1320 = vmatpush1.msra.mxu0 0.0
        %1321 = vmatprep.subr.mxu0 0.0
        %1322 = vmatpush1.msra.mxu0 0.0
        %1323 = vmatprep.subr.mxu0 0.0
        %1324 = vmatpush1.msra.mxu0 0.0
        %1325 = vmatprep.subr.mxu0 0.0
        %1326 = vmatpush1.msra.mxu0 0.0
        %1327 = vmatprep.subr.mxu0 0.0
        %1328 = vmatpush1.msra.mxu0 0.0
        %1329 = vmatprep.mubr.f32.mxu0 0.0
        %1330 = vmatmul.mubr.f32.gmra.mrb[0].mxu0 %v1263
        %v1331 = vpop.f32.mrb[0].mxu0
        %v1332 = vadd.f32 0.0, %v1331
        %v1333 = vpop.f32.mrb[0].mxu0
        %1334 = vdwg.mxu0
        %v1335 = vsel %vm470, %v451, 0
        %1337 = vmatprep.subr.mxu0 0.0
        %1338 = vmatpush1.msra.mxu0 %v354
        %1339 = vmatprep.subr.mxu0 0.0
        %1340 = vmatpush1.msra.mxu0 %v355
        %1341 = vmatprep.subr.mxu0 0.0
        %1342 = vmatpush1.msra.mxu0 %v356
        %1343 = vmatprep.subr.mxu0 0.0
        %1344 = vmatpush1.msra.mxu0 %v357
        %1345 = vmatprep.subr.mxu0 0.0
        %1346 = vmatpush1.msra.mxu0 0.0
        %1347 = vmatprep.subr.mxu0 0.0
        %1348 = vmatpush1.msra.mxu0 0.0
        %1349 = vmatprep.subr.mxu0 0.0
        %1350 = vmatpush1.msra.mxu0 0.0
        %1351 = vmatprep.subr.mxu0 0.0
        %1352 = vmatpush1.msra.mxu0 0.0
        %1353 = vmatprep.subr.mxu0 0.0
        %1354 = vmatpush1.msra.mxu0 0.0
        %1355 = vmatprep.subr.mxu0 0.0
        %1356 = vmatpush1.msra.mxu0 0.0
        %1357 = vmatprep.subr.mxu0 0.0
        %1358 = vmatpush1.msra.mxu0 0.0
        %1359 = vmatprep.subr.mxu0 0.0
        %1360 = vmatpush1.msra.mxu0 0.0
        %1361 = vmatprep.subr.mxu0 0.0
        %1362 = vmatpush1.msra.mxu0 0.0
        %1363 = vmatprep.subr.mxu0 0.0
        %1364 = vmatpush1.msra.mxu0 0.0
        %1365 = vmatprep.subr.mxu0 0.0
        %1366 = vmatpush1.msra.mxu0 0.0
        %1367 = vmatprep.subr.mxu0 0.0
        %1368 = vmatpush1.msra.mxu0 0.0
        %1369 = vmatprep.subr.mxu0 0.0
        %1370 = vmatpush1.msra.mxu0 0.0
        %1371 = vmatprep.subr.mxu0 0.0
        %1372 = vmatpush1.msra.mxu0 0.0
        %1373 = vmatprep.subr.mxu0 0.0
        %1374 = vmatpush1.msra.mxu0 0.0
        %1375 = vmatprep.subr.mxu0 0.0
        %1376 = vmatpush1.msra.mxu0 0.0
        %1377 = vmatprep.subr.mxu0 0.0
        %1378 = vmatpush1.msra.mxu0 0.0
        %1379 = vmatprep.subr.mxu0 0.0
        %1380 = vmatpush1.msra.mxu0 0.0
        %1381 = vmatprep.subr.mxu0 0.0
        %1382 = vmatpush1.msra.mxu0 0.0
        %1383 = vmatprep.subr.mxu0 0.0
        %1384 = vmatpush1.msra.mxu0 0.0
        %1385 = vmatprep.subr.mxu0 0.0
        %1386 = vmatpush1.msra.mxu0 0.0
        %1387 = vmatprep.subr.mxu0 0.0
        %1388 = vmatpush1.msra.mxu0 0.0
        %1389 = vmatprep.subr.mxu0 0.0
        %1390 = vmatpush1.msra.mxu0 0.0
        %1391 = vmatprep.subr.mxu0 0.0
        %1392 = vmatpush1.msra.mxu0 0.0
        %1393 = vmatprep.subr.mxu0 0.0
        %1394 = vmatpush1.msra.mxu0 0.0
        %1395 = vmatprep.subr.mxu0 0.0
        %1396 = vmatpush1.msra.mxu0 0.0
        %1397 = vmatprep.subr.mxu0 0.0
        %1398 = vmatpush1.msra.mxu0 0.0
        %1399 = vmatprep.subr.mxu0 0.0
        %1400 = vmatpush1.msra.mxu0 0.0
        %1401 = vmatprep.mubr.f32.mxu0 0.0
        %1402 = vmatmul.mubr.f32.gmra.mrb[0].mxu0 %v1335
        %v1403 = vpop.f32.mrb[0].mxu0
        %v1404 = vadd.f32 0.0, %v1403
        %v1405 = vpop.f32.mrb[0].mxu0
        %1406 = vdwg.mxu0
        %v1407 = vsel %vm470, %v465, 0
        %1409 = vmatprep.subr.mxu0 0.0
        %1410 = vmatpush1.msra.mxu0 %v358
        %1411 = vmatprep.subr.mxu0 0.0
        %1412 = vmatpush1.msra.mxu0 %v359
        %1413 = vmatprep.subr.mxu0 0.0
        %1414 = vmatpush1.msra.mxu0 %v360
        %1415 = vmatprep.subr.mxu0 0.0
        %1416 = vmatpush1.msra.mxu0 %v361
        %1417 = vmatprep.subr.mxu0 0.0
        %1418 = vmatpush1.msra.mxu0 0.0
        %1419 = vmatprep.subr.mxu0 0.0
        %1420 = vmatpush1.msra.mxu0 0.0
        %1421 = vmatprep.subr.mxu0 0.0
        %1422 = vmatpush1.msra.mxu0 0.0
        %1423 = vmatprep.subr.mxu0 0.0
        %1424 = vmatpush1.msra.mxu0 0.0
        %1425 = vmatprep.subr.mxu0 0.0
        %1426 = vmatpush1.msra.mxu0 0.0
        %1427 = vmatprep.subr.mxu0 0.0
        %1428 = vmatpush1.msra.mxu0 0.0
        %1429 = vmatprep.subr.mxu0 0.0
        %1430 = vmatpush1.msra.mxu0 0.0
        %1431 = vmatprep.subr.mxu0 0.0
        %1432 = vmatpush1.msra.mxu0 0.0
        %1433 = vmatprep.subr.mxu0 0.0
        %1434 = vmatpush1.msra.mxu0 0.0
        %1435 = vmatprep.subr.mxu0 0.0
        %1436 = vmatpush1.msra.mxu0 0.0
        %1437 = vmatprep.subr.mxu0 0.0
        %1438 = vmatpush1.msra.mxu0 0.0
        %1439 = vmatprep.subr.mxu0 0.0
        %1440 = vmatpush1.msra.mxu0 0.0
        %1441 = vmatprep.subr.mxu0 0.0
        %1442 = vmatpush1.msra.mxu0 0.0
        %1443 = vmatprep.subr.mxu0 0.0
        %1444 = vmatpush1.msra.mxu0 0.0
        %1445 = vmatprep.subr.mxu0 0.0
        %1446 = vmatpush1.msra.mxu0 0.0
        %1447 = vmatprep.subr.mxu0 0.0
        %1448 = vmatpush1.msra.mxu0 0.0
        %1449 = vmatprep.subr.mxu0 0.0
        %1450 = vmatpush1.msra.mxu0 0.0
        %1451 = vmatprep.subr.mxu0 0.0
        %1452 = vmatpush1.msra.mxu0 0.0
        %1453 = vmatprep.subr.mxu0 0.0
        %1454 = vmatpush1.msra.mxu0 0.0
        %1455 = vmatprep.subr.mxu0 0.0
        %1456 = vmatpush1.msra.mxu0 0.0
        %1457 = vmatprep.subr.mxu0 0.0
        %1458 = vmatpush1.msra.mxu0 0.0
        %1459 = vmatprep.subr.mxu0 0.0
        %1460 = vmatpush1.msra.mxu0 0.0
        %1461 = vmatprep.subr.mxu0 0.0
        %1462 = vmatpush1.msra.mxu0 0.0
        %1463 = vmatprep.subr.mxu0 0.0
        %1464 = vmatpush1.msra.mxu0 0.0
        %1465 = vmatprep.subr.mxu0 0.0
        %1466 = vmatpush1.msra.mxu0 0.0
        %1467 = vmatprep.subr.mxu0 0.0
        %1468 = vmatpush1.msra.mxu0 0.0
        %1469 = vmatprep.subr.mxu0 0.0
        %1470 = vmatpush1.msra.mxu0 0.0
        %1471 = vmatprep.subr.mxu0 0.0
        %1472 = vmatpush1.msra.mxu0 0.0
        %1473 = vmatprep.mubr.f32.mxu0 0.0
        %1474 = vmatmul.mubr.f32.gmra.mrb[0].mxu0 %v1407
        %v1475 = vpop.f32.mrb[0].mxu0
        %v1476 = vadd.f32 0.0, %v1475
        %v1477 = vpop.f32.mrb[0].mxu0
        %1478 = vdwg.mxu0
        %v1479 = vsel %vm470, %v467, 0
        %1481 = vmatprep.subr.mxu0 0.0
        %1482 = vmatpush1.msra.mxu0 %v362
        %1483 = vmatprep.subr.mxu0 0.0
        %1484 = vmatpush1.msra.mxu0 %v363
        %1485 = vmatprep.subr.mxu0 0.0
        %1486 = vmatpush1.msra.mxu0 %v364
        %1487 = vmatprep.subr.mxu0 0.0
        %1488 = vmatpush1.msra.mxu0 %v365
        %1489 = vmatprep.subr.mxu0 0.0
        %1490 = vmatpush1.msra.mxu0 0.0
        %1491 = vmatprep.subr.mxu0 0.0
        %1492 = vmatpush1.msra.mxu0 0.0
        %1493 = vmatprep.subr.mxu0 0.0
        %1494 = vmatpush1.msra.mxu0 0.0
        %1495 = vmatprep.subr.mxu0 0.0
        %1496 = vmatpush1.msra.mxu0 0.0
        %1497 = vmatprep.subr.mxu0 0.0
        %1498 = vmatpush1.msra.mxu0 0.0
        %1499 = vmatprep.subr.mxu0 0.0
        %1500 = vmatpush1.msra.mxu0 0.0
        %1501 = vmatprep.subr.mxu0 0.0
        %1502 = vmatpush1.msra.mxu0 0.0
        %1503 = vmatprep.subr.mxu0 0.0
        %1504 = vmatpush1.msra.mxu0 0.0
        %1505 = vmatprep.subr.mxu0 0.0
        %1506 = vmatpush1.msra.mxu0 0.0
        %1507 = vmatprep.subr.mxu0 0.0
        %1508 = vmatpush1.msra.mxu0 0.0
        %1509 = vmatprep.subr.mxu0 0.0
        %1510 = vmatpush1.msra.mxu0 0.0
        %1511 = vmatprep.subr.mxu0 0.0
        %1512 = vmatpush1.msra.mxu0 0.0
        %1513 = vmatprep.subr.mxu0 0.0
        %1514 = vmatpush1.msra.mxu0 0.0
        %1515 = vmatprep.subr.mxu0 0.0
        %1516 = vmatpush1.msra.mxu0 0.0
        %1517 = vmatprep.subr.mxu0 0.0
        %1518 = vmatpush1.msra.mxu0 0.0
        %1519 = vmatprep.subr.mxu0 0.0
        %1520 = vmatpush1.msra.mxu0 0.0
        %1521 = vmatprep.subr.mxu0 0.0
        %1522 = vmatpush1.msra.mxu0 0.0
        %1523 = vmatprep.subr.mxu0 0.0
        %1524 = vmatpush1.msra.mxu0 0.0
        %1525 = vmatprep.subr.mxu0 0.0
        %1526 = vmatpush1.msra.mxu0 0.0
        %1527 = vmatprep.subr.mxu0 0.0
        %1528 = vmatpush1.msra.mxu0 0.0
        %1529 = vmatprep.subr.mxu0 0.0
        %1530 = vmatpush1.msra.mxu0 0.0
        %1531 = vmatprep.subr.mxu0 0.0
        %1532 = vmatpush1.msra.mxu0 0.0
        %1533 = vmatprep.subr.mxu0 0.0
        %1534 = vmatpush1.msra.mxu0 0.0
        %1535 = vmatprep.subr.mxu0 0.0
        %1536 = vmatpush1.msra.mxu0 0.0
        %1537 = vmatprep.subr.mxu0 0.0
        %1538 = vmatpush1.msra.mxu0 0.0
        %1539 = vmatprep.subr.mxu0 0.0
        %1540 = vmatpush1.msra.mxu0 0.0
        %1541 = vmatprep.subr.mxu0 0.0
        %1542 = vmatpush1.msra.mxu0 0.0
        %1543 = vmatprep.subr.mxu0 0.0
        %1544 = vmatpush1.msra.mxu0 0.0
        %1545 = vmatprep.mubr.f32.mxu0 0.0
        %1546 = vmatmul.mubr.f32.gmra.mrb[0].mxu0 %v1479
        %v1547 = vpop.f32.mrb[0].mxu0
        %v1548 = vadd.f32 0.0, %v1547
        %v1549 = vpop.f32.mrb[0].mxu0
        %1550 = vdwg.mxu0
        %v1551 = vsel %vm470, %v469, 0
        %1553 = vmatprep.subr.mxu0 0.0
        %1554 = vmatpush1.msra.mxu0 %v366
        %1555 = vmatprep.subr.mxu0 0.0
        %1556 = vmatpush1.msra.mxu0 %v367
        %1557 = vmatprep.subr.mxu0 0.0
        %1558 = vmatpush1.msra.mxu0 %v368
        %1559 = vmatprep.subr.mxu0 0.0
        %1560 = vmatpush1.msra.mxu0 %v369
        %1561 = vmatprep.subr.mxu0 0.0
        %1562 = vmatpush1.msra.mxu0 0.0
        %1563 = vmatprep.subr.mxu0 0.0
        %1564 = vmatpush1.msra.mxu0 0.0
        %1565 = vmatprep.subr.mxu0 0.0
        %1566 = vmatpush1.msra.mxu0 0.0
        %1567 = vmatprep.subr.mxu0 0.0
        %1568 = vmatpush1.msra.mxu0 0.0
        %1569 = vmatprep.subr.mxu0 0.0
        %1570 = vmatpush1.msra.mxu0 0.0
        %1571 = vmatprep.subr.mxu0 0.0
        %1572 = vmatpush1.msra.mxu0 0.0
        %1573 = vmatprep.subr.mxu0 0.0
        %1574 = vmatpush1.msra.mxu0 0.0
        %1575 = vmatprep.subr.mxu0 0.0
        %1576 = vmatpush1.msra.mxu0 0.0
        %1577 = vmatprep.subr.mxu0 0.0
        %1578 = vmatpush1.msra.mxu0 0.0
        %1579 = vmatprep.subr.mxu0 0.0
        %1580 = vmatpush1.msra.mxu0 0.0
        %1581 = vmatprep.subr.mxu0 0.0
        %1582 = vmatpush1.msra.mxu0 0.0
        %1583 = vmatprep.subr.mxu0 0.0
        %1584 = vmatpush1.msra.mxu0 0.0
        %1585 = vmatprep.subr.mxu0 0.0
        %1586 = vmatpush1.msra.mxu0 0.0
        %1587 = vmatprep.subr.mxu0 0.0
        %1588 = vmatpush1.msra.mxu0 0.0
        %1589 = vmatprep.subr.mxu0 0.0
        %1590 = vmatpush1.msra.mxu0 0.0
        %1591 = vmatprep.subr.mxu0 0.0
        %1592 = vmatpush1.msra.mxu0 0.0
        %1593 = vmatprep.subr.mxu0 0.0
        %1594 = vmatpush1.msra.mxu0 0.0
        %1595 = vmatprep.subr.mxu0 0.0
        %1596 = vmatpush1.msra.mxu0 0.0
        %1597 = vmatprep.subr.mxu0 0.0
        %1598 = vmatpush1.msra.mxu0 0.0
        %1599 = vmatprep.subr.mxu0 0.0
        %1600 = vmatpush1.msra.mxu0 0.0
        %1601 = vmatprep.subr.mxu0 0.0
        %1602 = vmatpush1.msra.mxu0 0.0
        %1603 = vmatprep.subr.mxu0 0.0
        %1604 = vmatpush1.msra.mxu0 0.0
        %1605 = vmatprep.subr.mxu0 0.0
        %1606 = vmatpush1.msra.mxu0 0.0
        %1607 = vmatprep.subr.mxu0 0.0
        %1608 = vmatpush1.msra.mxu0 0.0
        %1609 = vmatprep.subr.mxu0 0.0
        %1610 = vmatpush1.msra.mxu0 0.0
        %1611 = vmatprep.subr.mxu0 0.0
        %1612 = vmatpush1.msra.mxu0 0.0
        %1613 = vmatprep.subr.mxu0 0.0
        %1614 = vmatpush1.msra.mxu0 0.0
        %1615 = vmatprep.subr.mxu0 0.0
        %1616 = vmatpush1.msra.mxu0 0.0
        %1617 = vmatprep.mubr.f32.mxu0 0.0
        %1618 = vmatmul.mubr.f32.gmra.mrb[0].mxu0 %v1551
        %v1619 = vpop.f32.mrb[0].mxu0
        %v1620 = vadd.f32 0.0, %v1619
        %v1621 = vpop.f32.mrb[0].mxu0
        %1622 = vdwg.mxu0
        %v1625 = vcombine.high %v304, %v304
        %v1627 = vunpack.c.l.s4 1966171168
        %v1628 = vunpack.c.0.s8 %v1627
        %v1629 = vlaneseq
        %v1630 = vshrl.u32 %v1629, 7
        %v1631 = vsub.s32 %v1628, %v1630
        %v1632 = vrot.slane %v304, %v1631
        %v1634 = vunpack.c.l.s4 1966171168
        %v1635 = vunpack.c.0.s8 %v1634
        %v1636 = vlaneseq
        %v1637 = vshrl.u32 %v1636, 7
        %v1638 = vsub.s32 %v1635, %v1637
        %v1639 = vrot.slane %v1625, %v1638
        %v1640 = vcombine.high %v1632, %v1632
        %v1641 = vcombine.high %v1639, %v1639
        %v1643 = vunpack.c.l.s4 1966171168
        %v1644 = vunpack.c.0.s8 %v1643
        %v1645 = vlaneseq
        %v1646 = vshrl.u32 %v1645, 7
        %v1647 = vsub.s32 %v1644, %v1646
        %v1648 = vrot.slane %v1632, %v1647
        %v1650 = vunpack.c.l.s4 1966171168
        %v1651 = vunpack.c.0.s8 %v1650
        %v1652 = vlaneseq
        %v1653 = vshrl.u32 %v1652, 7
        %v1654 = vsub.s32 %v1651, %v1653
        %v1655 = vrot.slane %v1639, %v1654
        %v1657 = vunpack.c.l.s4 1966171168
        %v1658 = vunpack.c.0.s8 %v1657
        %v1659 = vlaneseq
        %v1660 = vshrl.u32 %v1659, 7
        %v1661 = vsub.s32 %v1658, %v1660
        %v1662 = vrot.slane %v1640, %v1661
        %v1664 = vunpack.c.l.s4 1966171168
        %v1665 = vunpack.c.0.s8 %v1664
        %v1666 = vlaneseq
        %v1667 = vshrl.u32 %v1666, 7
        %v1668 = vsub.s32 %v1665, %v1667
        %v1669 = vrot.slane %v1641, %v1668
        %v1670 = vcombine.high %v1648, %v1648
        %v1671 = vcombine.high %v1655, %v1655
        %v1672 = vcombine.high %v1662, %v1662
        %v1673 = vcombine.high %v1669, %v1669
        %v1674 = vcombine.high %v305, %v305
        %v1676 = vunpack.c.l.s4 1966171168
        %v1677 = vunpack.c.0.s8 %v1676
        %v1678 = vlaneseq
        %v1679 = vshrl.u32 %v1678, 7
        %v1680 = vsub.s32 %v1677, %v1679
        %v1681 = vrot.slane %v305, %v1680
        %v1683 = vunpack.c.l.s4 1966171168
        %v1684 = vunpack.c.0.s8 %v1683
        %v1685 = vlaneseq
        %v1686 = vshrl.u32 %v1685, 7
        %v1687 = vsub.s32 %v1684, %v1686
        %v1688 = vrot.slane %v1674, %v1687
        %v1689 = vcombine.high %v1681, %v1681
        %v1690 = vcombine.high %v1688, %v1688
        %v1692 = vunpack.c.l.s4 1966171168
        %v1693 = vunpack.c.0.s8 %v1692
        %v1694 = vlaneseq
        %v1695 = vshrl.u32 %v1694, 7
        %v1696 = vsub.s32 %v1693, %v1695
        %v1697 = vrot.slane %v1681, %v1696
        %v1699 = vunpack.c.l.s4 1966171168
        %v1700 = vunpack.c.0.s8 %v1699
        %v1701 = vlaneseq
        %v1702 = vshrl.u32 %v1701, 7
        %v1703 = vsub.s32 %v1700, %v1702
        %v1704 = vrot.slane %v1688, %v1703
        %v1706 = vunpack.c.l.s4 1966171168
        %v1707 = vunpack.c.0.s8 %v1706
        %v1708 = vlaneseq
        %v1709 = vshrl.u32 %v1708, 7
        %v1710 = vsub.s32 %v1707, %v1709
        %v1711 = vrot.slane %v1689, %v1710
        %v1713 = vunpack.c.l.s4 1966171168
        %v1714 = vunpack.c.0.s8 %v1713
        %v1715 = vlaneseq
        %v1716 = vshrl.u32 %v1715, 7
        %v1717 = vsub.s32 %v1714, %v1716
        %v1718 = vrot.slane %v1690, %v1717
        %v1719 = vcombine.high %v1697, %v1697
        %v1720 = vcombine.high %v1704, %v1704
        %v1721 = vcombine.high %v1711, %v1711
        %v1722 = vcombine.high %v1718, %v1718
        %v1723 = vsel %vm470, %v1648, 0
        %v1726 = vsel %vm470, %v306, 0
        %v1729 = vsel %vm470, %v307, 0
        %v1732 = vsel %vm470, %v308, 0
        %v1735 = vsel %vm470, %v309, 0
        %1737 = vmatprep.subr.mxu0 0.0
        %1738 = vmatpush1.xpose.msra.mxu0 %v1726
        %1739 = vmatprep.subr.mxu0 0.0
        %1740 = vmatpush1.xpose.msra.mxu0 %v1729
        %1741 = vmatprep.subr.mxu0 0.0
        %1742 = vmatpush1.xpose.msra.mxu0 %v1732
        %1743 = vmatprep.subr.mxu0 0.0
        %1744 = vmatpush1.xpose.msra.mxu0 %v1735
        %1745 = vmatprep.subr.mxu0 0.0
        %1746 = vmatpush1.xpose.msra.mxu0 0.0
        %1747 = vmatprep.subr.mxu0 0.0
        %1748 = vmatpush1.xpose.msra.mxu0 0.0
        %1749 = vmatprep.subr.mxu0 0.0
        %1750 = vmatpush1.xpose.msra.mxu0 0.0
        %1751 = vmatprep.subr.mxu0 0.0
        %1752 = vmatpush1.xpose.msra.mxu0 0.0
        %1753 = vmatprep.subr.mxu0 0.0
        %1754 = vmatpush1.xpose.msra.mxu0 0.0
        %1755 = vmatprep.subr.mxu0 0.0
        %1756 = vmatpush1.xpose.msra.mxu0 0.0
        %1757 = vmatprep.subr.mxu0 0.0
        %1758 = vmatpush1.xpose.msra.mxu0 0.0
        %1759 = vmatprep.subr.mxu0 0.0
        %1760 = vmatpush1.xpose.msra.mxu0 0.0
        %1761 = vmatprep.subr.mxu0 0.0
        %1762 = vmatpush1.xpose.msra.mxu0 0.0
        %1763 = vmatprep.subr.mxu0 0.0
        %1764 = vmatpush1.xpose.msra.mxu0 0.0
        %1765 = vmatprep.subr.mxu0 0.0
        %1766 = vmatpush1.xpose.msra.mxu0 0.0
        %1767 = vmatprep.subr.mxu0 0.0
        %1768 = vmatpush1.xpose.msra.mxu0 0.0
        %1769 = vmatprep.subr.mxu0 0.0
        %1770 = vmatpush1.xpose.msra.mxu0 0.0
        %1771 = vmatprep.subr.mxu0 0.0
        %1772 = vmatpush1.xpose.msra.mxu0 0.0
        %1773 = vmatprep.subr.mxu0 0.0
        %1774 = vmatpush1.xpose.msra.mxu0 0.0
        %1775 = vmatprep.subr.mxu0 0.0
        %1776 = vmatpush1.xpose.msra.mxu0 0.0
        %1777 = vmatprep.subr.mxu0 0.0
        %1778 = vmatpush1.xpose.msra.mxu0 0.0
        %1779 = vmatprep.subr.mxu0 0.0
        %1780 = vmatpush1.xpose.msra.mxu0 0.0
        %1781 = vmatprep.subr.mxu0 0.0
        %1782 = vmatpush1.xpose.msra.mxu0 0.0
        %1783 = vmatprep.subr.mxu0 0.0
        %1784 = vmatpush1.xpose.msra.mxu0 0.0
        %1785 = vmatprep.subr.mxu0 0.0
        %1786 = vmatpush1.xpose.msra.mxu0 0.0
        %1787 = vmatprep.subr.mxu0 0.0
        %1788 = vmatpush1.xpose.msra.mxu0 0.0
        %1789 = vmatprep.subr.mxu0 0.0
        %1790 = vmatpush1.xpose.msra.mxu0 0.0
        %1791 = vmatprep.subr.mxu0 0.0
        %1792 = vmatpush1.xpose.msra.mxu0 0.0
        %1793 = vmatprep.subr.mxu0 0.0
        %1794 = vmatpush1.xpose.msra.mxu0 0.0
        %1795 = vmatprep.subr.mxu0 0.0
        %1796 = vmatpush1.xpose.msra.mxu0 0.0
        %1797 = vmatprep.subr.mxu0 0.0
        %1798 = vmatpush1.xpose.msra.mxu0 0.0
        %1799 = vmatprep.subr.mxu0 0.0
        %1800 = vmatpush1.xpose.msra.mxu0 0.0
        %1801 = vmatprep.mubr.f32.mxu0 0.0
        %1802 = vmatmul.mubr.f32.gmra.mrb[0].mxu0 %v1723
        %v1803 = vpop.f32.mrb[0].mxu0
        %v1804 = vadd.f32 0.0, %v1803
        %v1805 = vpop.f32.mrb[0].mxu0
        %1806 = vdwg.mxu0
        %v1807 = vsel %vm470, %v1662, 0
        %v1810 = vsel %vm470, %v310, 0
        %v1813 = vsel %vm470, %v311, 0
        %v1816 = vsel %vm470, %v312, 0
        %v1819 = vsel %vm470, %v313, 0
        %1821 = vmatprep.subr.mxu0 0.0
        %1822 = vmatpush1.xpose.msra.mxu0 %v1810
        %1823 = vmatprep.subr.mxu0 0.0
        %1824 = vmatpush1.xpose.msra.mxu0 %v1813
        %1825 = vmatprep.subr.mxu0 0.0
        %1826 = vmatpush1.xpose.msra.mxu0 %v1816
        %1827 = vmatprep.subr.mxu0 0.0
        %1828 = vmatpush1.xpose.msra.mxu0 %v1819
        %1829 = vmatprep.subr.mxu0 0.0
        %1830 = vmatpush1.xpose.msra.mxu0 0.0
        %1831 = vmatprep.subr.mxu0 0.0
        %1832 = vmatpush1.xpose.msra.mxu0 0.0
        %1833 = vmatprep.subr.mxu0 0.0
        %1834 = vmatpush1.xpose.msra.mxu0 0.0
        %1835 = vmatprep.subr.mxu0 0.0
        %1836 = vmatpush1.xpose.msra.mxu0 0.0
        %1837 = vmatprep.subr.mxu0 0.0
        %1838 = vmatpush1.xpose.msra.mxu0 0.0
        %1839 = vmatprep.subr.mxu0 0.0
        %1840 = vmatpush1.xpose.msra.mxu0 0.0
        %1841 = vmatprep.subr.mxu0 0.0
        %1842 = vmatpush1.xpose.msra.mxu0 0.0
        %1843 = vmatprep.subr.mxu0 0.0
        %1844 = vmatpush1.xpose.msra.mxu0 0.0
        %1845 = vmatprep.subr.mxu0 0.0
        %1846 = vmatpush1.xpose.msra.mxu0 0.0
        %1847 = vmatprep.subr.mxu0 0.0
        %1848 = vmatpush1.xpose.msra.mxu0 0.0
        %1849 = vmatprep.subr.mxu0 0.0
        %1850 = vmatpush1.xpose.msra.mxu0 0.0
        %1851 = vmatprep.subr.mxu0 0.0
        %1852 = vmatpush1.xpose.msra.mxu0 0.0
        %1853 = vmatprep.subr.mxu0 0.0
        %1854 = vmatpush1.xpose.msra.mxu0 0.0
        %1855 = vmatprep.subr.mxu0 0.0
        %1856 = vmatpush1.xpose.msra.mxu0 0.0
        %1857 = vmatprep.subr.mxu0 0.0
        %1858 = vmatpush1.xpose.msra.mxu0 0.0
        %1859 = vmatprep.subr.mxu0 0.0
        %1860 = vmatpush1.xpose.msra.mxu0 0.0
        %1861 = vmatprep.subr.mxu0 0.0
        %1862 = vmatpush1.xpose.msra.mxu0 0.0
        %1863 = vmatprep.subr.mxu0 0.0
        %1864 = vmatpush1.xpose.msra.mxu0 0.0
        %1865 = vmatprep.subr.mxu0 0.0
        %1866 = vmatpush1.xpose.msra.mxu0 0.0
        %1867 = vmatprep.subr.mxu0 0.0
        %1868 = vmatpush1.xpose.msra.mxu0 0.0
        %1869 = vmatprep.subr.mxu0 0.0
        %1870 = vmatpush1.xpose.msra.mxu0 0.0
        %1871 = vmatprep.subr.mxu0 0.0
        %1872 = vmatpush1.xpose.msra.mxu0 0.0
        %1873 = vmatprep.subr.mxu0 0.0
        %1874 = vmatpush1.xpose.msra.mxu0 0.0
        %1875 = vmatprep.subr.mxu0 0.0
        %1876 = vmatpush1.xpose.msra.mxu0 0.0
        %1877 = vmatprep.subr.mxu0 0.0
        %1878 = vmatpush1.xpose.msra.mxu0 0.0
        %1879 = vmatprep.subr.mxu0 0.0
        %1880 = vmatpush1.xpose.msra.mxu0 0.0
        %1881 = vmatprep.subr.mxu0 0.0
        %1882 = vmatpush1.xpose.msra.mxu0 0.0
        %1883 = vmatprep.subr.mxu0 0.0
        %1884 = vmatpush1.xpose.msra.mxu0 0.0
        %1885 = vmatprep.mubr.f32.mxu0 0.0
        %1886 = vmatmul.mubr.f32.gmra.mrb[0].mxu0 %v1807
        %v1887 = vpop.f32.mrb[0].mxu0
        %v1888 = vadd.f32 0.0, %v1887
        %v1889 = vpop.f32.mrb[0].mxu0
        %1890 = vdwg.mxu0
        %v1891 = vsel %vm470, %v1670, 0
        %v1894 = vsel %vm470, %v314, 0
        %v1897 = vsel %vm470, %v315, 0
        %v1900 = vsel %vm470, %v316, 0
        %v1903 = vsel %vm470, %v317, 0
        %1905 = vmatprep.subr.mxu0 0.0
        %1906 = vmatpush1.xpose.msra.mxu0 %v1894
        %1907 = vmatprep.subr.mxu0 0.0
        %1908 = vmatpush1.xpose.msra.mxu0 %v1897
        %1909 = vmatprep.subr.mxu0 0.0
        %1910 = vmatpush1.xpose.msra.mxu0 %v1900
        %1911 = vmatprep.subr.mxu0 0.0
        %1912 = vmatpush1.xpose.msra.mxu0 %v1903
        %1913 = vmatprep.subr.mxu0 0.0
        %1914 = vmatpush1.xpose.msra.mxu0 0.0
        %1915 = vmatprep.subr.mxu0 0.0
        %1916 = vmatpush1.xpose.msra.mxu0 0.0
        %1917 = vmatprep.subr.mxu0 0.0
        %1918 = vmatpush1.xpose.msra.mxu0 0.0
        %1919 = vmatprep.subr.mxu0 0.0
        %1920 = vmatpush1.xpose.msra.mxu0 0.0
        %1921 = vmatprep.subr.mxu0 0.0
        %1922 = vmatpush1.xpose.msra.mxu0 0.0
        %1923 = vmatprep.subr.mxu0 0.0
        %1924 = vmatpush1.xpose.msra.mxu0 0.0
        %1925 = vmatprep.subr.mxu0 0.0
        %1926 = vmatpush1.xpose.msra.mxu0 0.0
        %1927 = vmatprep.subr.mxu0 0.0
        %1928 = vmatpush1.xpose.msra.mxu0 0.0
        %1929 = vmatprep.subr.mxu0 0.0
        %1930 = vmatpush1.xpose.msra.mxu0 0.0
        %1931 = vmatprep.subr.mxu0 0.0
        %1932 = vmatpush1.xpose.msra.mxu0 0.0
        %1933 = vmatprep.subr.mxu0 0.0
        %1934 = vmatpush1.xpose.msra.mxu0 0.0
        %1935 = vmatprep.subr.mxu0 0.0
        %1936 = vmatpush1.xpose.msra.mxu0 0.0
        %1937 = vmatprep.subr.mxu0 0.0
        %1938 = vmatpush1.xpose.msra.mxu0 0.0
        %1939 = vmatprep.subr.mxu0 0.0
        %1940 = vmatpush1.xpose.msra.mxu0 0.0
        %1941 = vmatprep.subr.mxu0 0.0
        %1942 = vmatpush1.xpose.msra.mxu0 0.0
        %1943 = vmatprep.subr.mxu0 0.0
        %1944 = vmatpush1.xpose.msra.mxu0 0.0
        %1945 = vmatprep.subr.mxu0 0.0
        %1946 = vmatpush1.xpose.msra.mxu0 0.0
        %1947 = vmatprep.subr.mxu0 0.0
        %1948 = vmatpush1.xpose.msra.mxu0 0.0
        %1949 = vmatprep.subr.mxu0 0.0
        %1950 = vmatpush1.xpose.msra.mxu0 0.0
        %1951 = vmatprep.subr.mxu0 0.0
        %1952 = vmatpush1.xpose.msra.mxu0 0.0
        %1953 = vmatprep.subr.mxu0 0.0
        %1954 = vmatpush1.xpose.msra.mxu0 0.0
        %1955 = vmatprep.subr.mxu0 0.0
        %1956 = vmatpush1.xpose.msra.mxu0 0.0
        %1957 = vmatprep.subr.mxu0 0.0
        %1958 = vmatpush1.xpose.msra.mxu0 0.0
        %1959 = vmatprep.subr.mxu0 0.0
        %1960 = vmatpush1.xpose.msra.mxu0 0.0
        %1961 = vmatprep.subr.mxu0 0.0
        %1962 = vmatpush1.xpose.msra.mxu0 0.0
        %1963 = vmatprep.subr.mxu0 0.0
        %1964 = vmatpush1.xpose.msra.mxu0 0.0
        %1965 = vmatprep.subr.mxu0 0.0
        %1966 = vmatpush1.xpose.msra.mxu0 0.0
        %1967 = vmatprep.subr.mxu0 0.0
        %1968 = vmatpush1.xpose.msra.mxu0 0.0
        %1969 = vmatprep.mubr.f32.mxu0 0.0
        %1970 = vmatmul.mubr.f32.gmra.mrb[0].mxu0 %v1891
        %v1971 = vpop.f32.mrb[0].mxu0
        %v1972 = vadd.f32 0.0, %v1971
        %v1973 = vpop.f32.mrb[0].mxu0
        %1974 = vdwg.mxu0
        %v1975 = vsel %vm470, %v1672, 0
        %v1978 = vsel %vm470, %v318, 0
        %v1981 = vsel %vm470, %v319, 0
        %v1984 = vsel %vm470, %v320, 0
        %v1987 = vsel %vm470, %v321, 0
        %1989 = vmatprep.subr.mxu0 0.0
        %1990 = vmatpush1.xpose.msra.mxu0 %v1978
        %1991 = vmatprep.subr.mxu0 0.0
        %1992 = vmatpush1.xpose.msra.mxu0 %v1981
        %1993 = vmatprep.subr.mxu0 0.0
        %1994 = vmatpush1.xpose.msra.mxu0 %v1984
        %1995 = vmatprep.subr.mxu0 0.0
        %1996 = vmatpush1.xpose.msra.mxu0 %v1987
        %1997 = vmatprep.subr.mxu0 0.0
        %1998 = vmatpush1.xpose.msra.mxu0 0.0
        %1999 = vmatprep.subr.mxu0 0.0
        %2000 = vmatpush1.xpose.msra.mxu0 0.0
        %2001 = vmatprep.subr.mxu0 0.0
        %2002 = vmatpush1.xpose.msra.mxu0 0.0
        %2003 = vmatprep.subr.mxu0 0.0
        %2004 = vmatpush1.xpose.msra.mxu0 0.0
        %2005 = vmatprep.subr.mxu0 0.0
        %2006 = vmatpush1.xpose.msra.mxu0 0.0
        %2007 = vmatprep.subr.mxu0 0.0
        %2008 = vmatpush1.xpose.msra.mxu0 0.0
        %2009 = vmatprep.subr.mxu0 0.0
        %2010 = vmatpush1.xpose.msra.mxu0 0.0
        %2011 = vmatprep.subr.mxu0 0.0
        %2012 = vmatpush1.xpose.msra.mxu0 0.0
        %2013 = vmatprep.subr.mxu0 0.0
        %2014 = vmatpush1.xpose.msra.mxu0 0.0
        %2015 = vmatprep.subr.mxu0 0.0
        %2016 = vmatpush1.xpose.msra.mxu0 0.0
        %2017 = vmatprep.subr.mxu0 0.0
        %2018 = vmatpush1.xpose.msra.mxu0 0.0
        %2019 = vmatprep.subr.mxu0 0.0
        %2020 = vmatpush1.xpose.msra.mxu0 0.0
        %2021 = vmatprep.subr.mxu0 0.0
        %2022 = vmatpush1.xpose.msra.mxu0 0.0
        %2023 = vmatprep.subr.mxu0 0.0
        %2024 = vmatpush1.xpose.msra.mxu0 0.0
        %2025 = vmatprep.subr.mxu0 0.0
        %2026 = vmatpush1.xpose.msra.mxu0 0.0
        %2027 = vmatprep.subr.mxu0 0.0
        %2028 = vmatpush1.xpose.msra.mxu0 0.0
        %2029 = vmatprep.subr.mxu0 0.0
        %2030 = vmatpush1.xpose.msra.mxu0 0.0
        %2031 = vmatprep.subr.mxu0 0.0
        %2032 = vmatpush1.xpose.msra.mxu0 0.0
        %2033 = vmatprep.subr.mxu0 0.0
        %2034 = vmatpush1.xpose.msra.mxu0 0.0
        %2035 = vmatprep.subr.mxu0 0.0
        %2036 = vmatpush1.xpose.msra.mxu0 0.0
        %2037 = vmatprep.subr.mxu0 0.0
        %2038 = vmatpush1.xpose.msra.mxu0 0.0
        %2039 = vmatprep.subr.mxu0 0.0
        %2040 = vmatpush1.xpose.msra.mxu0 0.0
        %2041 = vmatprep.subr.mxu0 0.0
        %2042 = vmatpush1.xpose.msra.mxu0 0.0
        %2043 = vmatprep.subr.mxu0 0.0
        %2044 = vmatpush1.xpose.msra.mxu0 0.0
        %2045 = vmatprep.subr.mxu0 0.0
        %2046 = vmatpush1.xpose.msra.mxu0 0.0
        %2047 = vmatprep.subr.mxu0 0.0
        %2048 = vmatpush1.xpose.msra.mxu0 0.0
        %2049 = vmatprep.subr.mxu0 0.0
        %2050 = vmatpush1.xpose.msra.mxu0 0.0
        %2051 = vmatprep.subr.mxu0 0.0
        %2052 = vmatpush1.xpose.msra.mxu0 0.0
        %2053 = vmatprep.mubr.f32.mxu0 0.0
        %2054 = vmatmul.mubr.f32.gmra.mrb[0].mxu0 %v1975
        %v2055 = vpop.f32.mrb[0].mxu0
        %v2056 = vadd.f32 0.0, %v2055
        %v2057 = vpop.f32.mrb[0].mxu0
        %2058 = vdwg.mxu0
        %v2059 = vsel %vm470, %v1655, 0
        %v2062 = vsel %vm470, %v322, 0
        %v2065 = vsel %vm470, %v323, 0
        %v2068 = vsel %vm470, %v324, 0
        %v2071 = vsel %vm470, %v325, 0
        %2073 = vmatprep.subr.mxu0 0.0
        %2074 = vmatpush1.xpose.msra.mxu0 %v2062
        %2075 = vmatprep.subr.mxu0 0.0
        %2076 = vmatpush1.xpose.msra.mxu0 %v2065
        %2077 = vmatprep.subr.mxu0 0.0
        %2078 = vmatpush1.xpose.msra.mxu0 %v2068
        %2079 = vmatprep.subr.mxu0 0.0
        %2080 = vmatpush1.xpose.msra.mxu0 %v2071
        %2081 = vmatprep.subr.mxu0 0.0
        %2082 = vmatpush1.xpose.msra.mxu0 0.0
        %2083 = vmatprep.subr.mxu0 0.0
        %2084 = vmatpush1.xpose.msra.mxu0 0.0
        %2085 = vmatprep.subr.mxu0 0.0
        %2086 = vmatpush1.xpose.msra.mxu0 0.0
        %2087 = vmatprep.subr.mxu0 0.0
        %2088 = vmatpush1.xpose.msra.mxu0 0.0
        %2089 = vmatprep.subr.mxu0 0.0
        %2090 = vmatpush1.xpose.msra.mxu0 0.0
        %2091 = vmatprep.subr.mxu0 0.0
        %2092 = vmatpush1.xpose.msra.mxu0 0.0
        %2093 = vmatprep.subr.mxu0 0.0
        %2094 = vmatpush1.xpose.msra.mxu0 0.0
        %2095 = vmatprep.subr.mxu0 0.0
        %2096 = vmatpush1.xpose.msra.mxu0 0.0
        %2097 = vmatprep.subr.mxu0 0.0
        %2098 = vmatpush1.xpose.msra.mxu0 0.0
        %2099 = vmatprep.subr.mxu0 0.0
        %2100 = vmatpush1.xpose.msra.mxu0 0.0
        %2101 = vmatprep.subr.mxu0 0.0
        %2102 = vmatpush1.xpose.msra.mxu0 0.0
        %2103 = vmatprep.subr.mxu0 0.0
        %2104 = vmatpush1.xpose.msra.mxu0 0.0
        %2105 = vmatprep.subr.mxu0 0.0
        %2106 = vmatpush1.xpose.msra.mxu0 0.0
        %2107 = vmatprep.subr.mxu0 0.0
        %2108 = vmatpush1.xpose.msra.mxu0 0.0
        %2109 = vmatprep.subr.mxu0 0.0
        %2110 = vmatpush1.xpose.msra.mxu0 0.0
        %2111 = vmatprep.subr.mxu0 0.0
        %2112 = vmatpush1.xpose.msra.mxu0 0.0
        %2113 = vmatprep.subr.mxu0 0.0
        %2114 = vmatpush1.xpose.msra.mxu0 0.0
        %2115 = vmatprep.subr.mxu0 0.0
        %2116 = vmatpush1.xpose.msra.mxu0 0.0
        %2117 = vmatprep.subr.mxu0 0.0
        %2118 = vmatpush1.xpose.msra.mxu0 0.0
        %2119 = vmatprep.subr.mxu0 0.0
        %2120 = vmatpush1.xpose.msra.mxu0 0.0
        %2121 = vmatprep.subr.mxu0 0.0
        %2122 = vmatpush1.xpose.msra.mxu0 0.0
        %2123 = vmatprep.subr.mxu0 0.0
        %2124 = vmatpush1.xpose.msra.mxu0 0.0
        %2125 = vmatprep.subr.mxu0 0.0
        %2126 = vmatpush1.xpose.msra.mxu0 0.0
        %2127 = vmatprep.subr.mxu0 0.0
        %2128 = vmatpush1.xpose.msra.mxu0 0.0
        %2129 = vmatprep.subr.mxu0 0.0
        %2130 = vmatpush1.xpose.msra.mxu0 0.0
        %2131 = vmatprep.subr.mxu0 0.0
        %2132 = vmatpush1.xpose.msra.mxu0 0.0
        %2133 = vmatprep.subr.mxu0 0.0
        %2134 = vmatpush1.xpose.msra.mxu0 0.0
        %2135 = vmatprep.subr.mxu0 0.0
        %2136 = vmatpush1.xpose.msra.mxu0 0.0
        %2137 = vmatprep.mubr.f32.mxu0 0.0
        %2138 = vmatmul.mubr.f32.gmra.mrb[0].mxu0 %v2059
        %v2139 = vpop.f32.mrb[0].mxu0
        %v2140 = vadd.f32 0.0, %v2139
        %v2141 = vpop.f32.mrb[0].mxu0
        %2142 = vdwg.mxu0
        %v2143 = vsel %vm470, %v1669, 0
        %v2146 = vsel %vm470, %v326, 0
        %v2149 = vsel %vm470, %v327, 0
        %v2152 = vsel %vm470, %v328, 0
        %v2155 = vsel %vm470, %v329, 0
        %2157 = vmatprep.subr.mxu0 0.0
        %2158 = vmatpush1.xpose.msra.mxu0 %v2146
        %2159 = vmatprep.subr.mxu0 0.0
        %2160 = vmatpush1.xpose.msra.mxu0 %v2149
        %2161 = vmatprep.subr.mxu0 0.0
        %2162 = vmatpush1.xpose.msra.mxu0 %v2152
        %2163 = vmatprep.subr.mxu0 0.0
        %2164 = vmatpush1.xpose.msra.mxu0 %v2155
        %2165 = vmatprep.subr.mxu0 0.0
        %2166 = vmatpush1.xpose.msra.mxu0 0.0
        %2167 = vmatprep.subr.mxu0 0.0
        %2168 = vmatpush1.xpose.msra.mxu0 0.0
        %2169 = vmatprep.subr.mxu0 0.0
        %2170 = vmatpush1.xpose.msra.mxu0 0.0
        %2171 = vmatprep.subr.mxu0 0.0
        %2172 = vmatpush1.xpose.msra.mxu0 0.0
        %2173 = vmatprep.subr.mxu0 0.0
        %2174 = vmatpush1.xpose.msra.mxu0 0.0
        %2175 = vmatprep.subr.mxu0 0.0
        %2176 = vmatpush1.xpose.msra.mxu0 0.0
        %2177 = vmatprep.subr.mxu0 0.0
        %2178 = vmatpush1.xpose.msra.mxu0 0.0
        %2179 = vmatprep.subr.mxu0 0.0
        %2180 = vmatpush1.xpose.msra.mxu0 0.0
        %2181 = vmatprep.subr.mxu0 0.0
        %2182 = vmatpush1.xpose.msra.mxu0 0.0
        %2183 = vmatprep.subr.mxu0 0.0
        %2184 = vmatpush1.xpose.msra.mxu0 0.0
        %2185 = vmatprep.subr.mxu0 0.0
        %2186 = vmatpush1.xpose.msra.mxu0 0.0
        %2187 = vmatprep.subr.mxu0 0.0
        %2188 = vmatpush1.xpose.msra.mxu0 0.0
        %2189 = vmatprep.subr.mxu0 0.0
        %2190 = vmatpush1.xpose.msra.mxu0 0.0
        %2191 = vmatprep.subr.mxu0 0.0
        %2192 = vmatpush1.xpose.msra.mxu0 0.0
        %2193 = vmatprep.subr.mxu0 0.0
        %2194 = vmatpush1.xpose.msra.mxu0 0.0
        %2195 = vmatprep.subr.mxu0 0.0
        %2196 = vmatpush1.xpose.msra.mxu0 0.0
        %2197 = vmatprep.subr.mxu0 0.0
        %2198 = vmatpush1.xpose.msra.mxu0 0.0
        %2199 = vmatprep.subr.mxu0 0.0
        %2200 = vmatpush1.xpose.msra.mxu0 0.0
        %2201 = vmatprep.subr.mxu0 0.0
        %2202 = vmatpush1.xpose.msra.mxu0 0.0
        %2203 = vmatprep.subr.mxu0 0.0
        %2204 = vmatpush1.xpose.msra.mxu0 0.0
        %2205 = vmatprep.subr.mxu0 0.0
        %2206 = vmatpush1.xpose.msra.mxu0 0.0
        %2207 = vmatprep.subr.mxu0 0.0
        %2208 = vmatpush1.xpose.msra.mxu0 0.0
        %2209 = vmatprep.subr.mxu0 0.0
        %2210 = vmatpush1.xpose.msra.mxu0 0.0
        %2211 = vmatprep.subr.mxu0 0.0
        %2212 = vmatpush1.xpose.msra.mxu0 0.0
        %2213 = vmatprep.subr.mxu0 0.0
        %2214 = vmatpush1.xpose.msra.mxu0 0.0
        %2215 = vmatprep.subr.mxu0 0.0
        %2216 = vmatpush1.xpose.msra.mxu0 0.0
        %2217 = vmatprep.subr.mxu0 0.0
        %2218 = vmatpush1.xpose.msra.mxu0 0.0
        %2219 = vmatprep.subr.mxu0 0.0
        %2220 = vmatpush1.xpose.msra.mxu0 0.0
        %2221 = vmatprep.mubr.f32.mxu0 0.0
        %2222 = vmatmul.mubr.f32.gmra.mrb[0].mxu0 %v2143
        %v2223 = vpop.f32.mrb[0].mxu0
        %v2224 = vadd.f32 0.0, %v2223
        %v2225 = vpop.f32.mrb[0].mxu0
        %2226 = vdwg.mxu0
        %v2227 = vsel %vm470, %v1671, 0
        %v2230 = vsel %vm470, %v330, 0
        %v2233 = vsel %vm470, %v331, 0
        %v2236 = vsel %vm470, %v332, 0
        %v2239 = vsel %vm470, %v333, 0
        %2241 = vmatprep.subr.mxu0 0.0
        %2242 = vmatpush1.xpose.msra.mxu0 %v2230
        %2243 = vmatprep.subr.mxu0 0.0
        %2244 = vmatpush1.xpose.msra.mxu0 %v2233
        %2245 = vmatprep.subr.mxu0 0.0
        %2246 = vmatpush1.xpose.msra.mxu0 %v2236
        %2247 = vmatprep.subr.mxu0 0.0
        %2248 = vmatpush1.xpose.msra.mxu0 %v2239
        %2249 = vmatprep.subr.mxu0 0.0
        %2250 = vmatpush1.xpose.msra.mxu0 0.0
        %2251 = vmatprep.subr.mxu0 0.0
        %2252 = vmatpush1.xpose.msra.mxu0 0.0
        %2253 = vmatprep.subr.mxu0 0.0
        %2254 = vmatpush1.xpose.msra.mxu0 0.0
        %2255 = vmatprep.subr.mxu0 0.0
        %2256 = vmatpush1.xpose.msra.mxu0 0.0
        %2257 = vmatprep.subr.mxu0 0.0
        %2258 = vmatpush1.xpose.msra.mxu0 0.0
        %2259 = vmatprep.subr.mxu0 0.0
        %2260 = vmatpush1.xpose.msra.mxu0 0.0
        %2261 = vmatprep.subr.mxu0 0.0
        %2262 = vmatpush1.xpose.msra.mxu0 0.0
        %2263 = vmatprep.subr.mxu0 0.0
        %2264 = vmatpush1.xpose.msra.mxu0 0.0
        %2265 = vmatprep.subr.mxu0 0.0
        %2266 = vmatpush1.xpose.msra.mxu0 0.0
        %2267 = vmatprep.subr.mxu0 0.0
        %2268 = vmatpush1.xpose.msra.mxu0 0.0
        %2269 = vmatprep.subr.mxu0 0.0
        %2270 = vmatpush1.xpose.msra.mxu0 0.0
        %2271 = vmatprep.subr.mxu0 0.0
        %2272 = vmatpush1.xpose.msra.mxu0 0.0
        %2273 = vmatprep.subr.mxu0 0.0
        %2274 = vmatpush1.xpose.msra.mxu0 0.0
        %2275 = vmatprep.subr.mxu0 0.0
        %2276 = vmatpush1.xpose.msra.mxu0 0.0
        %2277 = vmatprep.subr.mxu0 0.0
        %2278 = vmatpush1.xpose.msra.mxu0 0.0
        %2279 = vmatprep.subr.mxu0 0.0
        %2280 = vmatpush1.xpose.msra.mxu0 0.0
        %2281 = vmatprep.subr.mxu0 0.0
        %2282 = vmatpush1.xpose.msra.mxu0 0.0
        %2283 = vmatprep.subr.mxu0 0.0
        %2284 = vmatpush1.xpose.msra.mxu0 0.0
        %2285 = vmatprep.subr.mxu0 0.0
        %2286 = vmatpush1.xpose.msra.mxu0 0.0
        %2287 = vmatprep.subr.mxu0 0.0
        %2288 = vmatpush1.xpose.msra.mxu0 0.0
        %2289 = vmatprep.subr.mxu0 0.0
        %2290 = vmatpush1.xpose.msra.mxu0 0.0
        %2291 = vmatprep.subr.mxu0 0.0
        %2292 = vmatpush1.xpose.msra.mxu0 0.0
        %2293 = vmatprep.subr.mxu0 0.0
        %2294 = vmatpush1.xpose.msra.mxu0 0.0
        %2295 = vmatprep.subr.mxu0 0.0
        %2296 = vmatpush1.xpose.msra.mxu0 0.0
        %2297 = vmatprep.subr.mxu0 0.0
        %2298 = vmatpush1.xpose.msra.mxu0 0.0
        %2299 = vmatprep.subr.mxu0 0.0
        %2300 = vmatpush1.xpose.msra.mxu0 0.0
        %2301 = vmatprep.subr.mxu0 0.0
        %2302 = vmatpush1.xpose.msra.mxu0 0.0
        %2303 = vmatprep.subr.mxu0 0.0
        %2304 = vmatpush1.xpose.msra.mxu0 0.0
        %2305 = vmatprep.mubr.f32.mxu0 0.0
        %2306 = vmatmul.mubr.f32.gmra.mrb[0].mxu0 %v2227
        %v2307 = vpop.f32.mrb[0].mxu0
        %v2308 = vadd.f32 0.0, %v2307
        %v2309 = vpop.f32.mrb[0].mxu0
        %2310 = vdwg.mxu0
        %v2311 = vsel %vm470, %v1673, 0
        %v2314 = vsel %vm470, %v334, 0
        %v2317 = vsel %vm470, %v335, 0
        %v2320 = vsel %vm470, %v336, 0
        %v2323 = vsel %vm470, %v337, 0
        %2325 = vmatprep.subr.mxu0 0.0
        %2326 = vmatpush1.xpose.msra.mxu0 %v2314
        %2327 = vmatprep.subr.mxu0 0.0
        %2328 = vmatpush1.xpose.msra.mxu0 %v2317
        %2329 = vmatprep.subr.mxu0 0.0
        %2330 = vmatpush1.xpose.msra.mxu0 %v2320
        %2331 = vmatprep.subr.mxu0 0.0
        %2332 = vmatpush1.xpose.msra.mxu0 %v2323
        %2333 = vmatprep.subr.mxu0 0.0
        %2334 = vmatpush1.xpose.msra.mxu0 0.0
        %2335 = vmatprep.subr.mxu0 0.0
        %2336 = vmatpush1.xpose.msra.mxu0 0.0
        %2337 = vmatprep.subr.mxu0 0.0
        %2338 = vmatpush1.xpose.msra.mxu0 0.0
        %2339 = vmatprep.subr.mxu0 0.0
        %2340 = vmatpush1.xpose.msra.mxu0 0.0
        %2341 = vmatprep.subr.mxu0 0.0
        %2342 = vmatpush1.xpose.msra.mxu0 0.0
        %2343 = vmatprep.subr.mxu0 0.0
        %2344 = vmatpush1.xpose.msra.mxu0 0.0
        %2345 = vmatprep.subr.mxu0 0.0
        %2346 = vmatpush1.xpose.msra.mxu0 0.0
        %2347 = vmatprep.subr.mxu0 0.0
        %2348 = vmatpush1.xpose.msra.mxu0 0.0
        %2349 = vmatprep.subr.mxu0 0.0
        %2350 = vmatpush1.xpose.msra.mxu0 0.0
        %2351 = vmatprep.subr.mxu0 0.0
        %2352 = vmatpush1.xpose.msra.mxu0 0.0
        %2353 = vmatprep.subr.mxu0 0.0
        %2354 = vmatpush1.xpose.msra.mxu0 0.0
        %2355 = vmatprep.subr.mxu0 0.0
        %2356 = vmatpush1.xpose.msra.mxu0 0.0
        %2357 = vmatprep.subr.mxu0 0.0
        %2358 = vmatpush1.xpose.msra.mxu0 0.0
        %2359 = vmatprep.subr.mxu0 0.0
        %2360 = vmatpush1.xpose.msra.mxu0 0.0
        %2361 = vmatprep.subr.mxu0 0.0
        %2362 = vmatpush1.xpose.msra.mxu0 0.0
        %2363 = vmatprep.subr.mxu0 0.0
        %2364 = vmatpush1.xpose.msra.mxu0 0.0
        %2365 = vmatprep.subr.mxu0 0.0
        %2366 = vmatpush1.xpose.msra.mxu0 0.0
        %2367 = vmatprep.subr.mxu0 0.0
        %2368 = vmatpush1.xpose.msra.mxu0 0.0
        %2369 = vmatprep.subr.mxu0 0.0
        %2370 = vmatpush1.xpose.msra.mxu0 0.0
        %2371 = vmatprep.subr.mxu0 0.0
        %2372 = vmatpush1.xpose.msra.mxu0 0.0
        %2373 = vmatprep.subr.mxu0 0.0
        %2374 = vmatpush1.xpose.msra.mxu0 0.0
        %2375 = vmatprep.subr.mxu0 0.0
        %2376 = vmatpush1.xpose.msra.mxu0 0.0
        %2377 = vmatprep.subr.mxu0 0.0
        %2378 = vmatpush1.xpose.msra.mxu0 0.0
        %2379 = vmatprep.subr.mxu0 0.0
        %2380 = vmatpush1.xpose.msra.mxu0 0.0
        %2381 = vmatprep.subr.mxu0 0.0
        %2382 = vmatpush1.xpose.msra.mxu0 0.0
        %2383 = vmatprep.subr.mxu0 0.0
        %2384 = vmatpush1.xpose.msra.mxu0 0.0
        %2385 = vmatprep.subr.mxu0 0.0
        %2386 = vmatpush1.xpose.msra.mxu0 0.0
        %2387 = vmatprep.subr.mxu0 0.0
        %2388 = vmatpush1.xpose.msra.mxu0 0.0
        %2389 = vmatprep.mubr.f32.mxu0 0.0
        %2390 = vmatmul.mubr.f32.gmra.mrb[0].mxu0 %v2311
        %v2391 = vpop.f32.mrb[0].mxu0
        %v2392 = vadd.f32 0.0, %v2391
        %v2393 = vpop.f32.mrb[0].mxu0
        %2394 = vdwg.mxu0
        %v2395 = vsel %vm470, %v1697, 0
        %v2398 = vsel %vm470, %v338, 0
        %v2401 = vsel %vm470, %v339, 0
        %v2404 = vsel %vm470, %v340, 0
        %v2407 = vsel %vm470, %v341, 0
        %2409 = vmatprep.subr.mxu0 0.0
        %2410 = vmatpush1.xpose.msra.mxu0 %v2398
        %2411 = vmatprep.subr.mxu0 0.0
        %2412 = vmatpush1.xpose.msra.mxu0 %v2401
        %2413 = vmatprep.subr.mxu0 0.0
        %2414 = vmatpush1.xpose.msra.mxu0 %v2404
        %2415 = vmatprep.subr.mxu0 0.0
        %2416 = vmatpush1.xpose.msra.mxu0 %v2407
        %2417 = vmatprep.subr.mxu0 0.0
        %2418 = vmatpush1.xpose.msra.mxu0 0.0
        %2419 = vmatprep.subr.mxu0 0.0
        %2420 = vmatpush1.xpose.msra.mxu0 0.0
        %2421 = vmatprep.subr.mxu0 0.0
        %2422 = vmatpush1.xpose.msra.mxu0 0.0
        %2423 = vmatprep.subr.mxu0 0.0
        %2424 = vmatpush1.xpose.msra.mxu0 0.0
        %2425 = vmatprep.subr.mxu0 0.0
        %2426 = vmatpush1.xpose.msra.mxu0 0.0
        %2427 = vmatprep.subr.mxu0 0.0
        %2428 = vmatpush1.xpose.msra.mxu0 0.0
        %2429 = vmatprep.subr.mxu0 0.0
        %2430 = vmatpush1.xpose.msra.mxu0 0.0
        %2431 = vmatprep.subr.mxu0 0.0
        %2432 = vmatpush1.xpose.msra.mxu0 0.0
        %2433 = vmatprep.subr.mxu0 0.0
        %2434 = vmatpush1.xpose.msra.mxu0 0.0
        %2435 = vmatprep.subr.mxu0 0.0
        %2436 = vmatpush1.xpose.msra.mxu0 0.0
        %2437 = vmatprep.subr.mxu0 0.0
        %2438 = vmatpush1.xpose.msra.mxu0 0.0
        %2439 = vmatprep.subr.mxu0 0.0
        %2440 = vmatpush1.xpose.msra.mxu0 0.0
        %2441 = vmatprep.subr.mxu0 0.0
        %2442 = vmatpush1.xpose.msra.mxu0 0.0
        %2443 = vmatprep.subr.mxu0 0.0
        %2444 = vmatpush1.xpose.msra.mxu0 0.0
        %2445 = vmatprep.subr.mxu0 0.0
        %2446 = vmatpush1.xpose.msra.mxu0 0.0
        %2447 = vmatprep.subr.mxu0 0.0
        %2448 = vmatpush1.xpose.msra.mxu0 0.0
        %2449 = vmatprep.subr.mxu0 0.0
        %2450 = vmatpush1.xpose.msra.mxu0 0.0
        %2451 = vmatprep.subr.mxu0 0.0
        %2452 = vmatpush1.xpose.msra.mxu0 0.0
        %2453 = vmatprep.subr.mxu0 0.0
        %2454 = vmatpush1.xpose.msra.mxu0 0.0
        %2455 = vmatprep.subr.mxu0 0.0
        %2456 = vmatpush1.xpose.msra.mxu0 0.0
        %2457 = vmatprep.subr.mxu0 0.0
        %2458 = vmatpush1.xpose.msra.mxu0 0.0
        %2459 = vmatprep.subr.mxu0 0.0
        %2460 = vmatpush1.xpose.msra.mxu0 0.0
        %2461 = vmatprep.subr.mxu0 0.0
        %2462 = vmatpush1.xpose.msra.mxu0 0.0
        %2463 = vmatprep.subr.mxu0 0.0
        %2464 = vmatpush1.xpose.msra.mxu0 0.0
        %2465 = vmatprep.subr.mxu0 0.0
        %2466 = vmatpush1.xpose.msra.mxu0 0.0
        %2467 = vmatprep.subr.mxu0 0.0
        %2468 = vmatpush1.xpose.msra.mxu0 0.0
        %2469 = vmatprep.subr.mxu0 0.0
        %2470 = vmatpush1.xpose.msra.mxu0 0.0
        %2471 = vmatprep.subr.mxu0 0.0
        %2472 = vmatpush1.xpose.msra.mxu0 0.0
        %2473 = vmatprep.mubr.f32.mxu0 0.0
        %2474 = vmatmul.mubr.f32.gmra.mrb[0].mxu0 %v2395
        %v2475 = vpop.f32.mrb[0].mxu0
        %v2476 = vadd.f32 0.0, %v2475
        %v2477 = vpop.f32.mrb[0].mxu0
        %2478 = vdwg.mxu0
        %v2479 = vsel %vm470, %v1711, 0
        %v2482 = vsel %vm470, %v342, 0
        %v2485 = vsel %vm470, %v343, 0
        %v2488 = vsel %vm470, %v344, 0
        %v2491 = vsel %vm470, %v345, 0
        %2493 = vmatprep.subr.mxu0 0.0
        %2494 = vmatpush1.xpose.msra.mxu0 %v2482
        %2495 = vmatprep.subr.mxu0 0.0
        %2496 = vmatpush1.xpose.msra.mxu0 %v2485
        %2497 = vmatprep.subr.mxu0 0.0
        %2498 = vmatpush1.xpose.msra.mxu0 %v2488
        %2499 = vmatprep.subr.mxu0 0.0
        %2500 = vmatpush1.xpose.msra.mxu0 %v2491
        %2501 = vmatprep.subr.mxu0 0.0
        %2502 = vmatpush1.xpose.msra.mxu0 0.0
        %2503 = vmatprep.subr.mxu0 0.0
        %2504 = vmatpush1.xpose.msra.mxu0 0.0
        %2505 = vmatprep.subr.mxu0 0.0
        %2506 = vmatpush1.xpose.msra.mxu0 0.0
        %2507 = vmatprep.subr.mxu0 0.0
        %2508 = vmatpush1.xpose.msra.mxu0 0.0
        %2509 = vmatprep.subr.mxu0 0.0
        %2510 = vmatpush1.xpose.msra.mxu0 0.0
        %2511 = vmatprep.subr.mxu0 0.0
        %2512 = vmatpush1.xpose.msra.mxu0 0.0
        %2513 = vmatprep.subr.mxu0 0.0
        %2514 = vmatpush1.xpose.msra.mxu0 0.0
        %2515 = vmatprep.subr.mxu0 0.0
        %2516 = vmatpush1.xpose.msra.mxu0 0.0
        %2517 = vmatprep.subr.mxu0 0.0
        %2518 = vmatpush1.xpose.msra.mxu0 0.0
        %2519 = vmatprep.subr.mxu0 0.0
        %2520 = vmatpush1.xpose.msra.mxu0 0.0
        %2521 = vmatprep.subr.mxu0 0.0
        %2522 = vmatpush1.xpose.msra.mxu0 0.0
        %2523 = vmatprep.subr.mxu0 0.0
        %2524 = vmatpush1.xpose.msra.mxu0 0.0
        %2525 = vmatprep.subr.mxu0 0.0
        %2526 = vmatpush1.xpose.msra.mxu0 0.0
        %2527 = vmatprep.subr.mxu0 0.0
        %2528 = vmatpush1.xpose.msra.mxu0 0.0
        %2529 = vmatprep.subr.mxu0 0.0
        %2530 = vmatpush1.xpose.msra.mxu0 0.0
        %2531 = vmatprep.subr.mxu0 0.0
        %2532 = vmatpush1.xpose.msra.mxu0 0.0
        %2533 = vmatprep.subr.mxu0 0.0
        %2534 = vmatpush1.xpose.msra.mxu0 0.0
        %2535 = vmatprep.subr.mxu0 0.0
        %2536 = vmatpush1.xpose.msra.mxu0 0.0
        %2537 = vmatprep.subr.mxu0 0.0
        %2538 = vmatpush1.xpose.msra.mxu0 0.0
        %2539 = vmatprep.subr.mxu0 0.0
        %2540 = vmatpush1.xpose.msra.mxu0 0.0
        %2541 = vmatprep.subr.mxu0 0.0
        %2542 = vmatpush1.xpose.msra.mxu0 0.0
        %2543 = vmatprep.subr.mxu0 0.0
        %2544 = vmatpush1.xpose.msra.mxu0 0.0
        %2545 = vmatprep.subr.mxu0 0.0
        %2546 = vmatpush1.xpose.msra.mxu0 0.0
        %2547 = vmatprep.subr.mxu0 0.0
        %2548 = vmatpush1.xpose.msra.mxu0 0.0
        %2549 = vmatprep.subr.mxu0 0.0
        %2550 = vmatpush1.xpose.msra.mxu0 0.0
        %2551 = vmatprep.subr.mxu0 0.0
        %2552 = vmatpush1.xpose.msra.mxu0 0.0
        %2553 = vmatprep.subr.mxu0 0.0
        %2554 = vmatpush1.xpose.msra.mxu0 0.0
        %2555 = vmatprep.subr.mxu0 0.0
        %2556 = vmatpush1.xpose.msra.mxu0 0.0
        %2557 = vmatprep.mubr.f32.mxu0 0.0
        %2558 = vmatmul.mubr.f32.gmra.mrb[0].mxu0 %v2479
        %v2559 = vpop.f32.mrb[0].mxu0
        %v2560 = vadd.f32 0.0, %v2559
        %v2561 = vpop.f32.mrb[0].mxu0
        %2562 = vdwg.mxu0
        %v2563 = vsel %vm470, %v1719, 0
        %v2566 = vsel %vm470, %v346, 0
        %v2569 = vsel %vm470, %v347, 0
        %v2572 = vsel %vm470, %v348, 0
        %v2575 = vsel %vm470, %v349, 0
        %2577 = vmatprep.subr.mxu0 0.0
        %2578 = vmatpush1.xpose.msra.mxu0 %v2566
        %2579 = vmatprep.subr.mxu0 0.0
        %2580 = vmatpush1.xpose.msra.mxu0 %v2569
        %2581 = vmatprep.subr.mxu0 0.0
        %2582 = vmatpush1.xpose.msra.mxu0 %v2572
        %2583 = vmatprep.subr.mxu0 0.0
        %2584 = vmatpush1.xpose.msra.mxu0 %v2575
        %2585 = vmatprep.subr.mxu0 0.0
        %2586 = vmatpush1.xpose.msra.mxu0 0.0
        %2587 = vmatprep.subr.mxu0 0.0
        %2588 = vmatpush1.xpose.msra.mxu0 0.0
        %2589 = vmatprep.subr.mxu0 0.0
        %2590 = vmatpush1.xpose.msra.mxu0 0.0
        %2591 = vmatprep.subr.mxu0 0.0
        %2592 = vmatpush1.xpose.msra.mxu0 0.0
        %2593 = vmatprep.subr.mxu0 0.0
        %2594 = vmatpush1.xpose.msra.mxu0 0.0
        %2595 = vmatprep.subr.mxu0 0.0
        %2596 = vmatpush1.xpose.msra.mxu0 0.0
        %2597 = vmatprep.subr.mxu0 0.0
        %2598 = vmatpush1.xpose.msra.mxu0 0.0
        %2599 = vmatprep.subr.mxu0 0.0
        %2600 = vmatpush1.xpose.msra.mxu0 0.0
        %2601 = vmatprep.subr.mxu0 0.0
        %2602 = vmatpush1.xpose.msra.mxu0 0.0
        %2603 = vmatprep.subr.mxu0 0.0
        %2604 = vmatpush1.xpose.msra.mxu0 0.0
        %2605 = vmatprep.subr.mxu0 0.0
        %2606 = vmatpush1.xpose.msra.mxu0 0.0
        %2607 = vmatprep.subr.mxu0 0.0
        %2608 = vmatpush1.xpose.msra.mxu0 0.0
        %2609 = vmatprep.subr.mxu0 0.0
        %2610 = vmatpush1.xpose.msra.mxu0 0.0
        %2611 = vmatprep.subr.mxu0 0.0
        %2612 = vmatpush1.xpose.msra.mxu0 0.0
        %2613 = vmatprep.subr.mxu0 0.0
        %2614 = vmatpush1.xpose.msra.mxu0 0.0
        %2615 = vmatprep.subr.mxu0 0.0
        %2616 = vmatpush1.xpose.msra.mxu0 0.0
        %2617 = vmatprep.subr.mxu0 0.0
        %2618 = vmatpush1.xpose.msra.mxu0 0.0
        %2619 = vmatprep.subr.mxu0 0.0
        %2620 = vmatpush1.xpose.msra.mxu0 0.0
        %2621 = vmatprep.subr.mxu0 0.0
        %2622 = vmatpush1.xpose.msra.mxu0 0.0
        %2623 = vmatprep.subr.mxu0 0.0
        %2624 = vmatpush1.xpose.msra.mxu0 0.0
        %2625 = vmatprep.subr.mxu0 0.0
        %2626 = vmatpush1.xpose.msra.mxu0 0.0
        %2627 = vmatprep.subr.mxu0 0.0
        %2628 = vmatpush1.xpose.msra.mxu0 0.0
        %2629 = vmatprep.subr.mxu0 0.0
        %2630 = vmatpush1.xpose.msra.mxu0 0.0
        %2631 = vmatprep.subr.mxu0 0.0
        %2632 = vmatpush1.xpose.msra.mxu0 0.0
        %2633 = vmatprep.subr.mxu0 0.0
        %2634 = vmatpush1.xpose.msra.mxu0 0.0
        %2635 = vmatprep.subr.mxu0 0.0
        %2636 = vmatpush1.xpose.msra.mxu0 0.0
        %2637 = vmatprep.subr.mxu0 0.0
        %2638 = vmatpush1.xpose.msra.mxu0 0.0
        %2639 = vmatprep.subr.mxu0 0.0
        %2640 = vmatpush1.xpose.msra.mxu0 0.0
        %2641 = vmatprep.mubr.f32.mxu0 0.0
        %2642 = vmatmul.mubr.f32.gmra.mrb[0].mxu0 %v2563
        %v2643 = vpop.f32.mrb[0].mxu0
        %v2644 = vadd.f32 0.0, %v2643
        %v2645 = vpop.f32.mrb[0].mxu0
        %2646 = vdwg.mxu0
        %v2647 = vsel %vm470, %v1721, 0
        %v2650 = vsel %vm470, %v350, 0
        %v2653 = vsel %vm470, %v351, 0
        %v2656 = vsel %vm470, %v352, 0
        %v2659 = vsel %vm470, %v353, 0
        %2661 = vmatprep.subr.mxu0 0.0
        %2662 = vmatpush1.xpose.msra.mxu0 %v2650
        %2663 = vmatprep.subr.mxu0 0.0
        %2664 = vmatpush1.xpose.msra.mxu0 %v2653
        %2665 = vmatprep.subr.mxu0 0.0
        %2666 = vmatpush1.xpose.msra.mxu0 %v2656
        %2667 = vmatprep.subr.mxu0 0.0
        %2668 = vmatpush1.xpose.msra.mxu0 %v2659
        %2669 = vmatprep.subr.mxu0 0.0
        %2670 = vmatpush1.xpose.msra.mxu0 0.0
        %2671 = vmatprep.subr.mxu0 0.0
        %2672 = vmatpush1.xpose.msra.mxu0 0.0
        %2673 = vmatprep.subr.mxu0 0.0
        %2674 = vmatpush1.xpose.msra.mxu0 0.0
        %2675 = vmatprep.subr.mxu0 0.0
        %2676 = vmatpush1.xpose.msra.mxu0 0.0
        %2677 = vmatprep.subr.mxu0 0.0
        %2678 = vmatpush1.xpose.msra.mxu0 0.0
        %2679 = vmatprep.subr.mxu0 0.0
        %2680 = vmatpush1.xpose.msra.mxu0 0.0
        %2681 = vmatprep.subr.mxu0 0.0
        %2682 = vmatpush1.xpose.msra.mxu0 0.0
        %2683 = vmatprep.subr.mxu0 0.0
        %2684 = vmatpush1.xpose.msra.mxu0 0.0
        %2685 = vmatprep.subr.mxu0 0.0
        %2686 = vmatpush1.xpose.msra.mxu0 0.0
        %2687 = vmatprep.subr.mxu0 0.0
        %2688 = vmatpush1.xpose.msra.mxu0 0.0
        %2689 = vmatprep.subr.mxu0 0.0
        %2690 = vmatpush1.xpose.msra.mxu0 0.0
        %2691 = vmatprep.subr.mxu0 0.0
        %2692 = vmatpush1.xpose.msra.mxu0 0.0
        %2693 = vmatprep.subr.mxu0 0.0
        %2694 = vmatpush1.xpose.msra.mxu0 0.0
        %2695 = vmatprep.subr.mxu0 0.0
        %2696 = vmatpush1.xpose.msra.mxu0 0.0
        %2697 = vmatprep.subr.mxu0 0.0
        %2698 = vmatpush1.xpose.msra.mxu0 0.0
        %2699 = vmatprep.subr.mxu0 0.0
        %2700 = vmatpush1.xpose.msra.mxu0 0.0
        %2701 = vmatprep.subr.mxu0 0.0
        %2702 = vmatpush1.xpose.msra.mxu0 0.0
        %2703 = vmatprep.subr.mxu0 0.0
        %2704 = vmatpush1.xpose.msra.mxu0 0.0
        %2705 = vmatprep.subr.mxu0 0.0
        %2706 = vmatpush1.xpose.msra.mxu0 0.0
        %2707 = vmatprep.subr.mxu0 0.0
        %2708 = vmatpush1.xpose.msra.mxu0 0.0
        %2709 = vmatprep.subr.mxu0 0.0
        %2710 = vmatpush1.xpose.msra.mxu0 0.0
        %2711 = vmatprep.subr.mxu0 0.0
        %2712 = vmatpush1.xpose.msra.mxu0 0.0
        %2713 = vmatprep.subr.mxu0 0.0
        %2714 = vmatpush1.xpose.msra.mxu0 0.0
        %2715 = vmatprep.subr.mxu0 0.0
        %2716 = vmatpush1.xpose.msra.mxu0 0.0
        %2717 = vmatprep.subr.mxu0 0.0
        %2718 = vmatpush1.xpose.msra.mxu0 0.0
        %2719 = vmatprep.subr.mxu0 0.0
        %2720 = vmatpush1.xpose.msra.mxu0 0.0
        %2721 = vmatprep.subr.mxu0 0.0
        %2722 = vmatpush1.xpose.msra.mxu0 0.0
        %2723 = vmatprep.subr.mxu0 0.0
        %2724 = vmatpush1.xpose.msra.mxu0 0.0
        %2725 = vmatprep.mubr.f32.mxu0 0.0
        %2726 = vmatmul.mubr.f32.gmra.mrb[0].mxu0 %v2647
        %v2727 = vpop.f32.mrb[0].mxu0
        %v2728 = vadd.f32 0.0, %v2727
        %v2729 = vpop.f32.mrb[0].mxu0
        %2730 = vdwg.mxu0
        %v2731 = vsel %vm470, %v1704, 0
        %v2734 = vsel %vm470, %v354, 0
        %v2737 = vsel %vm470, %v355, 0
        %v2740 = vsel %vm470, %v356, 0
        %v2743 = vsel %vm470, %v357, 0
        %2745 = vmatprep.subr.mxu0 0.0
        %2746 = vmatpush1.xpose.msra.mxu0 %v2734
        %2747 = vmatprep.subr.mxu0 0.0
        %2748 = vmatpush1.xpose.msra.mxu0 %v2737
        %2749 = vmatprep.subr.mxu0 0.0
        %2750 = vmatpush1.xpose.msra.mxu0 %v2740
        %2751 = vmatprep.subr.mxu0 0.0
        %2752 = vmatpush1.xpose.msra.mxu0 %v2743
        %2753 = vmatprep.subr.mxu0 0.0
        %2754 = vmatpush1.xpose.msra.mxu0 0.0
        %2755 = vmatprep.subr.mxu0 0.0
        %2756 = vmatpush1.xpose.msra.mxu0 0.0
        %2757 = vmatprep.subr.mxu0 0.0
        %2758 = vmatpush1.xpose.msra.mxu0 0.0
        %2759 = vmatprep.subr.mxu0 0.0
        %2760 = vmatpush1.xpose.msra.mxu0 0.0
        %2761 = vmatprep.subr.mxu0 0.0
        %2762 = vmatpush1.xpose.msra.mxu0 0.0
        %2763 = vmatprep.subr.mxu0 0.0
        %2764 = vmatpush1.xpose.msra.mxu0 0.0
        %2765 = vmatprep.subr.mxu0 0.0
        %2766 = vmatpush1.xpose.msra.mxu0 0.0
        %2767 = vmatprep.subr.mxu0 0.0
        %2768 = vmatpush1.xpose.msra.mxu0 0.0
        %2769 = vmatprep.subr.mxu0 0.0
        %2770 = vmatpush1.xpose.msra.mxu0 0.0
        %2771 = vmatprep.subr.mxu0 0.0
        %2772 = vmatpush1.xpose.msra.mxu0 0.0
        %2773 = vmatprep.subr.mxu0 0.0
        %2774 = vmatpush1.xpose.msra.mxu0 0.0
        %2775 = vmatprep.subr.mxu0 0.0
        %2776 = vmatpush1.xpose.msra.mxu0 0.0
        %2777 = vmatprep.subr.mxu0 0.0
        %2778 = vmatpush1.xpose.msra.mxu0 0.0
        %2779 = vmatprep.subr.mxu0 0.0
        %2780 = vmatpush1.xpose.msra.mxu0 0.0
        %2781 = vmatprep.subr.mxu0 0.0
        %2782 = vmatpush1.xpose.msra.mxu0 0.0
        %2783 = vmatprep.subr.mxu0 0.0
        %2784 = vmatpush1.xpose.msra.mxu0 0.0
        %2785 = vmatprep.subr.mxu0 0.0
        %2786 = vmatpush1.xpose.msra.mxu0 0.0
        %2787 = vmatprep.subr.mxu0 0.0
        %2788 = vmatpush1.xpose.msra.mxu0 0.0
        %2789 = vmatprep.subr.mxu0 0.0
        %2790 = vmatpush1.xpose.msra.mxu0 0.0
        %2791 = vmatprep.subr.mxu0 0.0
        %2792 = vmatpush1.xpose.msra.mxu0 0.0
        %2793 = vmatprep.subr.mxu0 0.0
        %2794 = vmatpush1.xpose.msra.mxu0 0.0
        %2795 = vmatprep.subr.mxu0 0.0
        %2796 = vmatpush1.xpose.msra.mxu0 0.0
        %2797 = vmatprep.subr.mxu0 0.0
        %2798 = vmatpush1.xpose.msra.mxu0 0.0
        %2799 = vmatprep.subr.mxu0 0.0
        %2800 = vmatpush1.xpose.msra.mxu0 0.0
        %2801 = vmatprep.subr.mxu0 0.0
        %2802 = vmatpush1.xpose.msra.mxu0 0.0
        %2803 = vmatprep.subr.mxu0 0.0
        %2804 = vmatpush1.xpose.msra.mxu0 0.0
        %2805 = vmatprep.subr.mxu0 0.0
        %2806 = vmatpush1.xpose.msra.mxu0 0.0
        %2807 = vmatprep.subr.mxu0 0.0
        %2808 = vmatpush1.xpose.msra.mxu0 0.0
        %2809 = vmatprep.mubr.f32.mxu0 0.0
        %2810 = vmatmul.mubr.f32.gmra.mrb[0].mxu0 %v2731
        %v2811 = vpop.f32.mrb[0].mxu0
        %v2812 = vadd.f32 0.0, %v2811
        %v2813 = vpop.f32.mrb[0].mxu0
        %2814 = vdwg.mxu0
        %v2815 = vsel %vm470, %v1718, 0
        %v2818 = vsel %vm470, %v358, 0
        %v2821 = vsel %vm470, %v359, 0
        %v2824 = vsel %vm470, %v360, 0
        %v2827 = vsel %vm470, %v361, 0
        %2829 = vmatprep.subr.mxu0 0.0
        %2830 = vmatpush1.xpose.msra.mxu0 %v2818
        %2831 = vmatprep.subr.mxu0 0.0
        %2832 = vmatpush1.xpose.msra.mxu0 %v2821
        %2833 = vmatprep.subr.mxu0 0.0
        %2834 = vmatpush1.xpose.msra.mxu0 %v2824
        %2835 = vmatprep.subr.mxu0 0.0
        %2836 = vmatpush1.xpose.msra.mxu0 %v2827
        %2837 = vmatprep.subr.mxu0 0.0
        %2838 = vmatpush1.xpose.msra.mxu0 0.0
        %2839 = vmatprep.subr.mxu0 0.0
        %2840 = vmatpush1.xpose.msra.mxu0 0.0
        %2841 = vmatprep.subr.mxu0 0.0
        %2842 = vmatpush1.xpose.msra.mxu0 0.0
        %2843 = vmatprep.subr.mxu0 0.0
        %2844 = vmatpush1.xpose.msra.mxu0 0.0
        %2845 = vmatprep.subr.mxu0 0.0
        %2846 = vmatpush1.xpose.msra.mxu0 0.0
        %2847 = vmatprep.subr.mxu0 0.0
        %2848 = vmatpush1.xpose.msra.mxu0 0.0
        %2849 = vmatprep.subr.mxu0 0.0
        %2850 = vmatpush1.xpose.msra.mxu0 0.0
        %2851 = vmatprep.subr.mxu0 0.0
        %2852 = vmatpush1.xpose.msra.mxu0 0.0
        %2853 = vmatprep.subr.mxu0 0.0
        %2854 = vmatpush1.xpose.msra.mxu0 0.0
        %2855 = vmatprep.subr.mxu0 0.0
        %2856 = vmatpush1.xpose.msra.mxu0 0.0
        %2857 = vmatprep.subr.mxu0 0.0
        %2858 = vmatpush1.xpose.msra.mxu0 0.0
        %2859 = vmatprep.subr.mxu0 0.0
        %2860 = vmatpush1.xpose.msra.mxu0 0.0
        %2861 = vmatprep.subr.mxu0 0.0
        %2862 = vmatpush1.xpose.msra.mxu0 0.0
        %2863 = vmatprep.subr.mxu0 0.0
        %2864 = vmatpush1.xpose.msra.mxu0 0.0
        %2865 = vmatprep.subr.mxu0 0.0
        %2866 = vmatpush1.xpose.msra.mxu0 0.0
        %2867 = vmatprep.subr.mxu0 0.0
        %2868 = vmatpush1.xpose.msra.mxu0 0.0
        %2869 = vmatprep.subr.mxu0 0.0
        %2870 = vmatpush1.xpose.msra.mxu0 0.0
        %2871 = vmatprep.subr.mxu0 0.0
        %2872 = vmatpush1.xpose.msra.mxu0 0.0
        %2873 = vmatprep.subr.mxu0 0.0
        %2874 = vmatpush1.xpose.msra.mxu0 0.0
        %2875 = vmatprep.subr.mxu0 0.0
        %2876 = vmatpush1.xpose.msra.mxu0 0.0
        %2877 = vmatprep.subr.mxu0 0.0
        %2878 = vmatpush1.xpose.msra.mxu0 0.0
        %2879 = vmatprep.subr.mxu0 0.0
        %2880 = vmatpush1.xpose.msra.mxu0 0.0
        %2881 = vmatprep.subr.mxu0 0.0
        %2882 = vmatpush1.xpose.msra.mxu0 0.0
        %2883 = vmatprep.subr.mxu0 0.0
        %2884 = vmatpush1.xpose.msra.mxu0 0.0
        %2885 = vmatprep.subr.mxu0 0.0
        %2886 = vmatpush1.xpose.msra.mxu0 0.0
        %2887 = vmatprep.subr.mxu0 0.0
        %2888 = vmatpush1.xpose.msra.mxu0 0.0
        %2889 = vmatprep.subr.mxu0 0.0
        %2890 = vmatpush1.xpose.msra.mxu0 0.0
        %2891 = vmatprep.subr.mxu0 0.0
        %2892 = vmatpush1.xpose.msra.mxu0 0.0
        %2893 = vmatprep.mubr.f32.mxu0 0.0
        %2894 = vmatmul.mubr.f32.gmra.mrb[0].mxu0 %v2815
        %v2895 = vpop.f32.mrb[0].mxu0
        %v2896 = vadd.f32 0.0, %v2895
        %v2897 = vpop.f32.mrb[0].mxu0
        %2898 = vdwg.mxu0
        %v2899 = vsel %vm470, %v1720, 0
        %v2902 = vsel %vm470, %v362, 0
        %v2905 = vsel %vm470, %v363, 0
        %v2908 = vsel %vm470, %v364, 0
        %v2911 = vsel %vm470, %v365, 0
        %2913 = vmatprep.subr.mxu0 0.0
        %2914 = vmatpush1.xpose.msra.mxu0 %v2902
        %2915 = vmatprep.subr.mxu0 0.0
        %2916 = vmatpush1.xpose.msra.mxu0 %v2905
        %2917 = vmatprep.subr.mxu0 0.0
        %2918 = vmatpush1.xpose.msra.mxu0 %v2908
        %2919 = vmatprep.subr.mxu0 0.0
        %2920 = vmatpush1.xpose.msra.mxu0 %v2911
        %2921 = vmatprep.subr.mxu0 0.0
        %2922 = vmatpush1.xpose.msra.mxu0 0.0
        %2923 = vmatprep.subr.mxu0 0.0
        %2924 = vmatpush1.xpose.msra.mxu0 0.0
        %2925 = vmatprep.subr.mxu0 0.0
        %2926 = vmatpush1.xpose.msra.mxu0 0.0
        %2927 = vmatprep.subr.mxu0 0.0
        %2928 = vmatpush1.xpose.msra.mxu0 0.0
        %2929 = vmatprep.subr.mxu0 0.0
        %2930 = vmatpush1.xpose.msra.mxu0 0.0
        %2931 = vmatprep.subr.mxu0 0.0
        %2932 = vmatpush1.xpose.msra.mxu0 0.0
        %2933 = vmatprep.subr.mxu0 0.0
        %2934 = vmatpush1.xpose.msra.mxu0 0.0
        %2935 = vmatprep.subr.mxu0 0.0
        %2936 = vmatpush1.xpose.msra.mxu0 0.0
        %2937 = vmatprep.subr.mxu0 0.0
        %2938 = vmatpush1.xpose.msra.mxu0 0.0
        %2939 = vmatprep.subr.mxu0 0.0
        %2940 = vmatpush1.xpose.msra.mxu0 0.0
        %2941 = vmatprep.subr.mxu0 0.0
        %2942 = vmatpush1.xpose.msra.mxu0 0.0
        %2943 = vmatprep.subr.mxu0 0.0
        %2944 = vmatpush1.xpose.msra.mxu0 0.0
        %2945 = vmatprep.subr.mxu0 0.0
        %2946 = vmatpush1.xpose.msra.mxu0 0.0
        %2947 = vmatprep.subr.mxu0 0.0
        %2948 = vmatpush1.xpose.msra.mxu0 0.0
        %2949 = vmatprep.subr.mxu0 0.0
        %2950 = vmatpush1.xpose.msra.mxu0 0.0
        %2951 = vmatprep.subr.mxu0 0.0
        %2952 = vmatpush1.xpose.msra.mxu0 0.0
        %2953 = vmatprep.subr.mxu0 0.0
        %2954 = vmatpush1.xpose.msra.mxu0 0.0
        %2955 = vmatprep.subr.mxu0 0.0
        %2956 = vmatpush1.xpose.msra.mxu0 0.0
        %2957 = vmatprep.subr.mxu0 0.0
        %2958 = vmatpush1.xpose.msra.mxu0 0.0
        %2959 = vmatprep.subr.mxu0 0.0
        %2960 = vmatpush1.xpose.msra.mxu0 0.0
        %2961 = vmatprep.subr.mxu0 0.0
        %2962 = vmatpush1.xpose.msra.mxu0 0.0
        %2963 = vmatprep.subr.mxu0 0.0
        %2964 = vmatpush1.xpose.msra.mxu0 0.0
        %2965 = vmatprep.subr.mxu0 0.0
        %2966 = vmatpush1.xpose.msra.mxu0 0.0
        %2967 = vmatprep.subr.mxu0 0.0
        %2968 = vmatpush1.xpose.msra.mxu0 0.0
        %2969 = vmatprep.subr.mxu0 0.0
        %2970 = vmatpush1.xpose.msra.mxu0 0.0
        %2971 = vmatprep.subr.mxu0 0.0
        %2972 = vmatpush1.xpose.msra.mxu0 0.0
        %2973 = vmatprep.subr.mxu0 0.0
        %2974 = vmatpush1.xpose.msra.mxu0 0.0
        %2975 = vmatprep.subr.mxu0 0.0
        %2976 = vmatpush1.xpose.msra.mxu0 0.0
        %2977 = vmatprep.mubr.f32.mxu0 0.0
        %2978 = vmatmul.mubr.f32.gmra.mrb[0].mxu0 %v2899
        %v2979 = vpop.f32.mrb[0].mxu0
        %v2980 = vadd.f32 0.0, %v2979
        %v2981 = vpop.f32.mrb[0].mxu0
        %2982 = vdwg.mxu0
        %v2983 = vsel %vm470, %v1722, 0
        %v2986 = vsel %vm470, %v366, 0
        %v2989 = vsel %vm470, %v367, 0
        %v2992 = vsel %vm470, %v368, 0
        %v2995 = vsel %vm470, %v369, 0
        %2997 = vmatprep.subr.mxu0 0.0
        %2998 = vmatpush1.xpose.msra.mxu0 %v2986
        %2999 = vmatprep.subr.mxu0 0.0
        %3000 = vmatpush1.xpose.msra.mxu0 %v2989
        %3001 = vmatprep.subr.mxu0 0.0
        %3002 = vmatpush1.xpose.msra.mxu0 %v2992
        %3003 = vmatprep.subr.mxu0 0.0
        %3004 = vmatpush1.xpose.msra.mxu0 %v2995
        %3005 = vmatprep.subr.mxu0 0.0
        %3006 = vmatpush1.xpose.msra.mxu0 0.0
        %3007 = vmatprep.subr.mxu0 0.0
        %3008 = vmatpush1.xpose.msra.mxu0 0.0
        %3009 = vmatprep.subr.mxu0 0.0
        %3010 = vmatpush1.xpose.msra.mxu0 0.0
        %3011 = vmatprep.subr.mxu0 0.0
        %3012 = vmatpush1.xpose.msra.mxu0 0.0
        %3013 = vmatprep.subr.mxu0 0.0
        %3014 = vmatpush1.xpose.msra.mxu0 0.0
        %3015 = vmatprep.subr.mxu0 0.0
        %3016 = vmatpush1.xpose.msra.mxu0 0.0
        %3017 = vmatprep.subr.mxu0 0.0
        %3018 = vmatpush1.xpose.msra.mxu0 0.0
        %3019 = vmatprep.subr.mxu0 0.0
        %3020 = vmatpush1.xpose.msra.mxu0 0.0
        %3021 = vmatprep.subr.mxu0 0.0
        %3022 = vmatpush1.xpose.msra.mxu0 0.0
        %3023 = vmatprep.subr.mxu0 0.0
        %3024 = vmatpush1.xpose.msra.mxu0 0.0
        %3025 = vmatprep.subr.mxu0 0.0
        %3026 = vmatpush1.xpose.msra.mxu0 0.0
        %3027 = vmatprep.subr.mxu0 0.0
        %3028 = vmatpush1.xpose.msra.mxu0 0.0
        %3029 = vmatprep.subr.mxu0 0.0
        %3030 = vmatpush1.xpose.msra.mxu0 0.0
        %3031 = vmatprep.subr.mxu0 0.0
        %3032 = vmatpush1.xpose.msra.mxu0 0.0
        %3033 = vmatprep.subr.mxu0 0.0
        %3034 = vmatpush1.xpose.msra.mxu0 0.0
        %3035 = vmatprep.subr.mxu0 0.0
        %3036 = vmatpush1.xpose.msra.mxu0 0.0
        %3037 = vmatprep.subr.mxu0 0.0
        %3038 = vmatpush1.xpose.msra.mxu0 0.0
        %3039 = vmatprep.subr.mxu0 0.0
        %3040 = vmatpush1.xpose.msra.mxu0 0.0
        %3041 = vmatprep.subr.mxu0 0.0
        %3042 = vmatpush1.xpose.msra.mxu0 0.0
        %3043 = vmatprep.subr.mxu0 0.0
        %3044 = vmatpush1.xpose.msra.mxu0 0.0
        %3045 = vmatprep.subr.mxu0 0.0
        %3046 = vmatpush1.xpose.msra.mxu0 0.0
        %3047 = vmatprep.subr.mxu0 0.0
        %3048 = vmatpush1.xpose.msra.mxu0 0.0
        %3049 = vmatprep.subr.mxu0 0.0
        %3050 = vmatpush1.xpose.msra.mxu0 0.0
        %3051 = vmatprep.subr.mxu0 0.0
        %3052 = vmatpush1.xpose.msra.mxu0 0.0
        %3053 = vmatprep.subr.mxu0 0.0
        %3054 = vmatpush1.xpose.msra.mxu0 0.0
        %3055 = vmatprep.subr.mxu0 0.0
        %3056 = vmatpush1.xpose.msra.mxu0 0.0
        %3057 = vmatprep.subr.mxu0 0.0
        %3058 = vmatpush1.xpose.msra.mxu0 0.0
        %3059 = vmatprep.subr.mxu0 0.0
        %3060 = vmatpush1.xpose.msra.mxu0 0.0
        %3061 = vmatprep.mubr.f32.mxu0 0.0
        %3062 = vmatmul.mubr.f32.gmra.mrb[0].mxu0 %v2983
        %v3063 = vpop.f32.mrb[0].mxu0
        %v3064 = vadd.f32 0.0, %v3063
        %v3065 = vpop.f32.mrb[0].mxu0
        %3066 = vdwg.mxu0
        %v3067 = vld [vmem:[%s287] sm:$0xff]
        %v3068 = vld [vmem:[%s287 + $0x8] sm:$0xff]
        %v3069 = vmul.f32 %v302, %v302
        %v3070 = vmul.f32 %v303, %v303
        %v3071 = vmul.f32 %v304, %v304
        %v3072 = vmul.f32 %v305, %v305
        %v3073 = vadd.f32 %v3069, %v3071
        %v3074 = vadd.f32 %v3070, %v3072
        %v3075 = vmul.f32 %v3073, 2.0
        %v3076 = vmul.f32 %v3074, 2.0
        %v3077 = vmul.f32 %v540, %v540
        %v3078 = vmul.f32 %v612, %v612
        %v3079 = vmul.f32 %v684, %v684
        %v3080 = vmul.f32 %v756, %v756
        %v3081 = vmul.f32 %v828, %v828
        %v3082 = vmul.f32 %v900, %v900
        %v3083 = vmul.f32 %v972, %v972
        %v3084 = vmul.f32 %v1044, %v1044
        %v3085 = vmul.f32 %v1116, %v1116
        %v3086 = vmul.f32 %v1188, %v1188
        %v3087 = vmul.f32 %v1260, %v1260
        %v3088 = vmul.f32 %v1332, %v1332
        %v3089 = vmul.f32 %v1404, %v1404
        %v3090 = vmul.f32 %v1476, %v1476
        %v3091 = vmul.f32 %v1548, %v1548
        %v3092 = vmul.f32 %v1620, %v1620
        %v3093 = vmul.f32 %v1804, %v1804
        %v3094 = vmul.f32 %v1888, %v1888
        %v3095 = vmul.f32 %v1972, %v1972
        %v3096 = vmul.f32 %v2056, %v2056
        %v3097 = vmul.f32 %v2140, %v2140
        %v3098 = vmul.f32 %v2224, %v2224
        %v3099 = vmul.f32 %v2308, %v2308
        %v3100 = vmul.f32 %v2392, %v2392
        %v3101 = vmul.f32 %v2476, %v2476
        %v3102 = vmul.f32 %v2560, %v2560
        %v3103 = vmul.f32 %v2644, %v2644
        %v3104 = vmul.f32 %v2728, %v2728
        %v3105 = vmul.f32 %v2812, %v2812
        %v3106 = vmul.f32 %v2896, %v2896
        %v3107 = vmul.f32 %v2980, %v2980
        %v3108 = vmul.f32 %v3064, %v3064
        %v3109 = vadd.f32 %v3077, %v3093
        %v3110 = vadd.f32 %v3078, %v3094
        %v3111 = vadd.f32 %v3079, %v3095
        %v3112 = vadd.f32 %v3080, %v3096
        %v3113 = vadd.f32 %v3081, %v3097
        %v3114 = vadd.f32 %v3082, %v3098
        %v3115 = vadd.f32 %v3083, %v3099
        %v3116 = vadd.f32 %v3084, %v3100
        %v3117 = vadd.f32 %v3085, %v3101
        %v3118 = vadd.f32 %v3086, %v3102
        %v3119 = vadd.f32 %v3087, %v3103
        %v3120 = vadd.f32 %v3088, %v3104
        %v3121 = vadd.f32 %v3089, %v3105
        %v3122 = vadd.f32 %v3090, %v3106
        %v3123 = vadd.f32 %v3091, %v3107
        %v3124 = vadd.f32 %v3092, %v3108
        %v3125 = vmul.f32 %v3109, 0.5
        %v3126 = vmul.f32 %v3110, 0.5
        %v3127 = vmul.f32 %v3111, 0.5
        %v3128 = vmul.f32 %v3112, 0.5
        %v3129 = vmul.f32 %v3113, 0.5
        %v3130 = vmul.f32 %v3114, 0.5
        %v3131 = vmul.f32 %v3115, 0.5
        %v3132 = vmul.f32 %v3116, 0.5
        %v3133 = vmul.f32 %v3117, 0.5
        %v3134 = vmul.f32 %v3118, 0.5
        %v3135 = vmul.f32 %v3119, 0.5
        %v3136 = vmul.f32 %v3120, 0.5
        %v3137 = vmul.f32 %v3121, 0.5
        %v3138 = vmul.f32 %v3122, 0.5
        %v3139 = vmul.f32 %v3123, 0.5
        %v3140 = vmul.f32 %v3124, 0.5
        %v3157 = vrot.slane %v3126, 7
        %vm3158 = vcmask 1041409
        %v3159 = vsel %vm3158, %v3157, %v3125
        %v3160 = vrot.slane %v3127, 6
        %vm3161 = vcmask 1042434
        %v3162 = vsel %vm3161, %v3160, %v3159
        %v3163 = vrot.slane %v3128, 5
        %vm3164 = vcmask 1043459
        %v3165 = vsel %vm3164, %v3163, %v3162
        %v3166 = vrot.slane %v3129, 4
        %vm3167 = vcmask 1044484
        %v3168 = vsel %vm3167, %v3166, %v3165
        %v3169 = vrot.slane %v3130, 3
        %vm3170 = vcmask 1045509
        %v3171 = vsel %vm3170, %v3169, %v3168
        %v3172 = vrot.slane %v3131, 2
        %vm3173 = vcmask 1046534
        %v3174 = vsel %vm3173, %v3172, %v3171
        %v3175 = vrot.slane %v3132, 1
        %vm3176 = vcmask 1047559
        %v3177 = vsel %vm3176, %v3175, %v3174
        %v3178 = vrot.slane %v3134, 7
        %v3179 = vsel %vm3158, %v3178, %v3133
        %v3180 = vrot.slane %v3135, 6
        %v3181 = vsel %vm3161, %v3180, %v3179
        %v3182 = vrot.slane %v3136, 5
        %v3183 = vsel %vm3164, %v3182, %v3181
        %v3184 = vrot.slane %v3137, 4
        %v3185 = vsel %vm3167, %v3184, %v3183
        %v3186 = vrot.slane %v3138, 3
        %v3187 = vsel %vm3170, %v3186, %v3185
        %v3188 = vrot.slane %v3139, 2
        %v3189 = vsel %vm3173, %v3188, %v3187
        %v3190 = vrot.slane %v3140, 1
        %v3191 = vsel %vm3176, %v3190, %v3189
        %v3194 = vadd.f32 %v3075, %v3177
        %v3195 = vadd.f32 %v3076, %v3191
        %v3196 = vadd.f32 %v3067, %v3194
        %v3197 = vadd.f32 %v3068, %v3195
        %3198 = vst.msk [vmem:[%s287] sm:$0xff] %vm470, %v3196
        %3199 = vst.msk [vmem:[%s287 + $0x8] sm:$0xff] %vm470, %v3197
        %s3200 = sand.u32 %s127, 1
        %s3201 = scalar_lea.sflag [#allocation4], %s3200
        %s3202 = sand.u32 %s127, 1
        %s3203 = smul.addr %s3202, 16
        %s3204 = scalar_lea.vmem [#allocation8], %s3203
        // Predicated region
        $region49: #{tpu_custom_call.1} parent=31 // pred_check
          %p3205 = pneg %p137
        $region50: #{tpu_custom_call.1} parent=31 // pred_check_branch
          %3207 = sbr.rel (%p3205) target = $region52
        $region51: #{tpu_custom_call.1} parent=31 // pred_region
          %s3208 = smul.u32 2, %s27
          %s3210 = ssub.s32 256, 256
          %3211 = vsyncadd %s3201, %s3210
          %s3212 = smul.addr %s3208, 128
          %s3213 = scalar_lea.hbm %s3, %s3212
          %s3214 = sshll.u32 %s3204, 4
          %s3215 = int_to_ptr.vmem [resolvable:$true] %s3214
          %3220 = dma.vmem_to_hbm [thread:$0]  %s3215, 256, %s3213, %s3201, 128, 128, 8
        $region52: #{tpu_custom_call.1} parent=31 // pred_fallthru
          _
      $region32: #{tpu_custom_call.1} parent=5 // pred_fallthru
        _
      %p3221 = scmp.le.s32.totalorder 2, %s18
      // Predicated region
      $region53: #{tpu_custom_call.1} parent=5 // pred_check
        %p3222 = pneg %p3221
      $region54: #{tpu_custom_call.1} parent=5 // pred_check_branch
        %3224 = sbr.rel (%p3222) target = $region56
      $region55: #{tpu_custom_call.1} parent=5 // pred_region
        %s3225 = ssub.s32 %s18, 2
        // Predicated region
        $region57: #{tpu_custom_call.1} parent=55 // pred_check
          %p3226 = pneg %p143
        $region58: #{tpu_custom_call.1} parent=55 // pred_check_branch
          %3228 = sbr.rel (%p3226) target = $region60
        $region59: #{tpu_custom_call.1} parent=55 // pred_region
          %s3229 = sand.u32 %s128, 1
          %s3230 = scalar_lea.sflag [#allocation4], %s3229
          %s3231 = sand.u32 %s128, 1
          %s3232 = smul.addr %s3231, 16
          %s3233 = scalar_lea.vmem [#allocation8], %s3232
          %3234 = dma.done %s3230, 256
        $region60: #{tpu_custom_call.1} parent=55 // pred_fallthru
          _
      $region56: #{tpu_custom_call.1} parent=5 // pred_fallthru
        _
    $region6: #{tpu_custom_call.1} parent=1 // loop_footer
      %s22 = sadd.s32 1, %s18
    $region7: #{tpu_custom_call.1} parent=1 // loop_footer_branch
      %17 = sbr.rel target = $region3
    $region8: #{tpu_custom_call.1} parent=1 // loop_exit
      _
    %3235 = vsyncpa [#allocation3], 1
    %s3236 = scalar_lea.sflag [#allocation3], 1
    %3237 = vsyncpa %s3236, 1
    %3238 = vsyncpa [#allocation6], 1
    %s3239 = scalar_lea.sflag [#allocation6], 1
    %3240 = vsyncpa %s3239, 1
    %3241 = vsyncpa [#allocation4], 1
    %s3242 = scalar_lea.sflag [#allocation4], 1
    %3243 = vsyncpa %s3242, 1

</llo_original>
